<compile_context>
chip_gen: v7x
topology: tpu7x:2x2x1
jax: 0.10.0
libtpu: 0.0.40
codegen_flags: <defaults>
</compile_context>

<pallas_src>
import numpy as np
import jax
import jax.numpy as jnp
from jax.experimental import pallas as pl
from jax.experimental.pallas import tpu as pltpu


# --------------------------------------------------------------------------
# PyTorch-exact bilinear weights (align_corners=False) along one axis.
# --------------------------------------------------------------------------
def _interp_weight_matrix(in_size: int, out_size: int) -> np.ndarray:
    w = np.zeros((out_size, in_size), dtype=np.float32)
    scale = in_size / out_size
    for dst in range(out_size):
        src = (dst + 0.5) * scale - 0.5
        if src < 0.0:          # PyTorch clamps non-cubic source index at 0
            src = 0.0
        i0 = int(np.floor(src))
        i0 = min(i0, in_size - 1)
        i1 = min(i0 + 1, in_size - 1)
        lam = src - i0
        w[dst, i0] += 1.0 - lam
        w[dst, i1] += lam
    return w


def _round_up(x: int, m: int) -> int:
    return ((x + m - 1) // m) * m


# --------------------------------------------------------------------------
# Generation-gated VMEM budgets.
# --------------------------------------------------------------------------
def _tpu_profile():
    kind = ""
    try:
        kind = (getattr(jax.devices()[0], "device_kind", "") or "").lower()
    except Exception:
        pass
    if "v7" in kind:   # 64 MiB physical VMEM, 3.2 TB/s HBM, 2 TensorCores
        return dict(vmem_limit=48 * 2**20, block_budget=6 * 2**20, two_core=True)
    if "v6" in kind:   # 128 MiB VMEM, ~1.4 TB/s HBM
        return dict(vmem_limit=96 * 2**20, block_budget=14 * 2**20, two_core=False)
    if "v5" in kind:   # 128 MiB VMEM, ~0.8 TB/s HBM
        return dict(vmem_limit=80 * 2**20, block_budget=10 * 2**20, two_core=False)
    # Unknown / older generation: stay conservative.
    return dict(vmem_limit=32 * 2**20, block_budget=4 * 2**20, two_core=False)


# --------------------------------------------------------------------------
# Images per grid step, from the *padded* VMEM footprint (double-buffered
# in/out blocks + in-kernel f32 temporaries + resident weights).
# --------------------------------------------------------------------------
def _pick_tb(b, h_in, w_in, h_out, w_out, h_first, flat_out, block_budget):
    lane, sub = 128, 8
    in_img = 4 * _round_up(h_in, sub) * _round_up(w_in, lane)       # 3-D input block
    if flat_out:
        out_img = 4 * _round_up(h_out * w_out, lane)                # lane-dense output
    else:
        out_img = 4 * _round_up(h_out, sub) * _round_up(w_out, lane)

    if h_first:
        scratch = 4 * (_round_up(w_in, sub) * _round_up(h_in, lane)     # x^T
                       + w_in * _round_up(h_out, lane)                  # t
                       + _round_up(h_out, sub) * _round_up(w_in, lane)  # t^T
                       + h_out * _round_up(w_out, lane))                # o2
    else:
        scratch = 4 * (h_in * _round_up(w_out, lane)                    # t
                       + _round_up(w_out, sub) * _round_up(h_in, lane)  # t^T
                       + w_out * _round_up(h_out, lane)                 # o2
                       + _round_up(h_out, sub) * _round_up(w_out, lane))  # out^T
    if flat_out:
        scratch += 4 * _round_up(h_out * w_out, lane)                   # staging

    # Resident weight matrices (assume both buffers allocated).
    weights = 2 * 4 * (_round_up(h_in, sub) * _round_up(h_out, lane)
                       + _round_up(w_in, sub) * _round_up(w_out, lane))
    budget = max(int(block_budget) - weights, 2 * 2**20)

    per_img = 2 * (in_img + out_img) + scratch      # x2 = double buffering of I/O
    tb = max(1, budget // per_img)
    tb = min(tb, b, 1024)
    if tb >= b:
        tb = b
    elif tb >= 8:
        tb -= tb % 8          # flat output block needs a sublane-aligned TB
    elif b >= 8:
        tb = 8
    else:
        tb = b
    return int(tb)


# --------------------------------------------------------------------------
# Kernel.
# --------------------------------------------------------------------------
def _make_kernel(tb, h_in, w_in, h_out, w_out, h_first, flat_out):
    # Group size for lane-aligned dense stores into the flat output block.
    g = 128 // w_out if (flat_out and 8 <= w_out < 128 and 128 % w_out == 0) else 1

    def kernel(x_ref, wht_ref, wwt_ref, o_ref):
        # x_ref:   (TB, H_in, W_in)
        # wht_ref: (H_in, H_out)   (= Wh^T, grid-resident)
        # wwt_ref: (W_in, W_out)   (= Ww^T, grid-resident)
        # o_ref:   (TB, H_out*W_out)  if flat_out else (TB, H_out, W_out)
        x = x_ref[...].astype(jnp.float32)                       # (TB, H_in, W_in)

        if h_first:
            # Height contraction first (best for upsampling).
            xm = jnp.swapaxes(x, 1, 2).reshape(tb * w_in, h_in)
            t = jnp.dot(xm, wht_ref[...],
                        preferred_element_type=jnp.float32)      # (TB*W_in, H_out)
            tm = jnp.swapaxes(t.reshape(tb, w_in, h_out), 1, 2)
            tm = tm.reshape(tb * h_out, w_in)
            o2 = jnp.dot(tm, wwt_ref[...],
                         preferred_element_type=jnp.float32)     # (TB*H_out, W_out)
            out3 = o2.reshape(tb, h_out, w_out)
        else:
            # Width contraction first (best for downsampling; no input transpose).
            xm = x.reshape(tb * h_in, w_in)
            t = jnp.dot(xm, wwt_ref[...],
                        preferred_element_type=jnp.float32)      # (TB*H_in, W_out)
            tm = jnp.swapaxes(t.reshape(tb, h_in, w_out), 1, 2)
            tm = tm.reshape(tb * w_out, h_in)
            o2 = jnp.dot(tm, wht_ref[...],
                         preferred_element_type=jnp.float32)     # (TB*W_out, H_out)
            out3 = jnp.swapaxes(o2.reshape(tb, w_out, h_out), 1, 2)

        out3 = out3.astype(o_ref.dtype)                          # (TB, H_out, W_out)

        if flat_out:
            # Assemble 128-lane chunks (XLU/VPU, which have slack) and issue
            # dense lane-aligned stores into the lane-dense output block.
            o = 0
            while o + g <= h_out:
                if g > 1:
                    chunk = jnp.concatenate(
                        [out3[:, o + j, :] for j in range(g)], axis=-1)
                else:
                    chunk = out3[:, o, :]
                o_ref[:, o * w_out:(o + g) * w_out] = chunk
                o += g
            while o < h_out:                                     # tail rows
                o_ref[:, o * w_out:(o + 1) * w_out] = out3[:, o, :]
                o += 1
        else:
            o_ref[...] = out3

    return kernel


# --------------------------------------------------------------------------
# Wrapper.
# --------------------------------------------------------------------------
def interpolate_bilinear(x: jax.Array, size) -> jax.Array:
    """x: (N, C, H_in, W_in) -> (N, C, H_out, W_out), bilinear, align_corners=False."""
    n, c, h_in, w_in = x.shape
    h_out, w_out = int(size[0]), int(size[1])
    b = n * c

    wht = jnp.asarray(_interp_weight_matrix(h_in, h_out).T)   # (H_in, H_out)
    wwt = jnp.asarray(_interp_weight_matrix(w_in, w_out).T)   # (W_in, W_out)

    # Contraction order: minimize transposed element volume.
    h_first = (h_in * w_in + w_in * h_out) <= (h_in * w_out + w_out * h_out)
    # Lane-dense flat output only pays off when W_out underfills the 128-lane
    # vreg; keep the unrolled store loop bounded.
    flat_out = (w_out % 128 != 0) and (h_out <= 256)

    prof = _tpu_profile()
    tb = _pick_tb(b, h_in, w_in, h_out, w_out, h_first, flat_out,
                  prof["block_budget"])

    # v7x only: give both TensorCores work, but never shrink a step below
    # ~2 MiB of HBM traffic (grid overhead would dominate otherwise).
    if prof["two_core"] and tb == b:
        half = _round_up(-(-b // 2), 8)
        if half < b and half * 4 * (h_in * w_in + h_out * w_out) >= 2 * 2**20:
            tb = half

    b_pad = int(pl.cdiv(b, tb)) * tb
    x_flat = x.reshape(b, h_in, w_in)
    if b_pad != b:
        x_flat = jnp.pad(x_flat, ((0, b_pad - b), (0, 0), (0, 0)))

    grid = (b_pad // tb,)

    if flat_out:
        out_shape = jax.ShapeDtypeStruct((b_pad, h_out * w_out), x.dtype)
        out_spec = pl.BlockSpec((tb, h_out * w_out), lambda i: (i, 0))
    else:
        out_shape = jax.ShapeDtypeStruct((b_pad, h_out, w_out), x.dtype)
        out_spec = pl.BlockSpec((tb, h_out, w_out), lambda i: (i, 0, 0))

    itemsize = jnp.dtype(x.dtype).itemsize
    if h_first:
        per_img_flops = 2 * (w_in * h_in * h_out + h_out * w_in * w_out)
    else:
        per_img_flops = 2 * (h_in * w_in * w_out + w_out * h_in * h_out)
    flops = int(b_pad * per_img_flops)
    bytes_accessed = int(b_pad * (h_in * w_in + h_out * w_out) * itemsize
                         + (wht.size + wwt.size) * 4)

    kernel = _make_kernel(tb, h_in, w_in, h_out, w_out, h_first, flat_out)

    out_flat = pl.pallas_call(
        kernel,
        out_shape=out_shape,
        grid_spec=pltpu.PrefetchScalarGridSpec(
            num_scalar_prefetch=0,
            grid=grid,
            in_specs=[
                pl.BlockSpec((tb, h_in, w_in), lambda i: (i, 0, 0)),
                pl.BlockSpec((h_in, h_out), lambda i: (0, 0)),
                pl.BlockSpec((w_in, w_out), lambda i: (0, 0)),
            ],
            out_specs=out_spec,
        ),
        compiler_params=pltpu.CompilerParams(
            dimension_semantics=("parallel",),
            vmem_limit_bytes=int(prof["vmem_limit"]),
        ),
        cost_estimate=pl.CostEstimate(
            flops=flops, transcendentals=0, bytes_accessed=bytes_accessed),
    )(x_flat, wht, wwt)

    out_flat = out_flat[:b]
    return out_flat.reshape(n, c, h_out, w_out)


class Interpolate:
    """JAX/Pallas mirror of the PyTorch Interpolate module (mode='bilinear')."""

    def __init__(self, size, mode):
        assert mode == "bilinear", "only bilinear mode implemented"
        self.size = size
        self.mode = mode
        # TODO(synk): other modes (nearest / bicubic / trilinear) not implemented.

    def __call__(self, x):
        return interpolate_bilinear(x, self.size)


def _reference_numpy(x: np.ndarray, size) -> np.ndarray:
    """Pure-numpy reference using the same separable formulation."""
    h_in, w_in = x.shape[2], x.shape[3]
    h_out, w_out = size
    wh = _interp_weight_matrix(h_in, h_out)
    ww = _interp_weight_matrix(w_in, w_out)
    return np.einsum("oh,nchw,pw->ncop", wh, x.astype(np.float32), ww)


if __name__ == "__main__":
    key = jax.random.PRNGKey(0)
    N, C, H, W = 2, 4, 16, 16
    out_size = (32, 32)

    x = jax.random.normal(key, (N, C, H, W), dtype=jnp.float32)

    module = Interpolate(size=out_size, mode="bilinear")
    y = module(x)
    y = jax.block_until_ready(y)

    assert y.shape == (N, C, out_size[0], out_size[1]), y.shape

    ref = _reference_numpy(np.asarray(x), out_size)
    np.testing.assert_allclose(np.asarray(y), ref, rtol=1e-5, atol=1e-5)

    print("KERNEL_OK")
</pallas_src>

<mosaic_0001>
module attributes {stable_mosaic.version = 11 : i64} {
  func.func @kernel(%arg0: i32, %arg1: memref<8x16x16xf32, #tpu.memory_space<vmem>>, %arg2: memref<16x32xf32, #tpu.memory_space<vmem>>, %arg3: memref<16x32xf32, #tpu.memory_space<vmem>>, %arg4: memref<8x1024xf32, #tpu.memory_space<vmem>>) attributes {dimension_semantics = [#tpu.dimension_semantics<parallel>], iteration_bounds = array<i64: 1>, scalar_prefetch = 0 : i64, scratch_operands = 0 : i64, tpu.core_type = #tpu.core_type<tc>, window_params = [{transform_indices = @transform_0, window_bounds = array<i64: 8, 16, 16>}, {pipeline_mode = #tpu.pipeline_mode<synchronous>, transform_indices = @transform_1, window_bounds = array<i64: 16, 32>}, {pipeline_mode = #tpu.pipeline_mode<synchronous>, transform_indices = @transform_2, window_bounds = array<i64: 16, 32>}, {transform_indices = @transform_3, window_bounds = array<i64: 8, 1024>}]} {
    %c0 = arith.constant 0 : index
    %c0_0 = arith.constant 0 : index
    %c0_1 = arith.constant 0 : index
    %0 = vector.load %arg1[%c0, %c0_0, %c0_1] : memref<8x16x16xf32, #tpu.memory_space<vmem>>, vector<8x16x16xf32>
    %1 = tpu.transpose %0, [0, 2, 1] : vector<8x16x16xf32> -> vector<8x16x16xf32>
    %2 = vector.shape_cast %1 : vector<8x16x16xf32> to vector<128x16xf32>
    %c0_2 = arith.constant 0 : index
    %c0_3 = arith.constant 0 : index
    %3 = vector.load %arg2[%c0_2, %c0_3] : memref<16x32xf32, #tpu.memory_space<vmem>>, vector<16x32xf32>
    %cst = arith.constant dense<0.000000e+00> : vector<128x32xf32>
    %4 = tpu.matmul %2, %3, %cst {dimension_numbers = #tpu.dot_dimension_numbers<[1], [0], [0], [1], [0, 0, 1, 1], [], []>} : vector<128x16xf32>, vector<16x32xf32>, vector<128x32xf32> -> vector<128x32xf32>
    %5 = vector.shape_cast %4 : vector<128x32xf32> to vector<8x16x32xf32>
    %6 = tpu.transpose %5, [0, 2, 1] : vector<8x16x32xf32> -> vector<8x32x16xf32>
    %7 = vector.shape_cast %6 : vector<8x32x16xf32> to vector<256x16xf32>
    %c0_4 = arith.constant 0 : index
    %c0_5 = arith.constant 0 : index
    %8 = vector.load %arg3[%c0_4, %c0_5] : memref<16x32xf32, #tpu.memory_space<vmem>>, vector<16x32xf32>
    %cst_6 = arith.constant dense<0.000000e+00> : vector<256x32xf32>
    %9 = tpu.matmul %7, %8, %cst_6 {dimension_numbers = #tpu.dot_dimension_numbers<[1], [0], [0], [1], [0, 0, 1, 1], [], []>} : vector<256x16xf32>, vector<16x32xf32>, vector<256x32xf32> -> vector<256x32xf32>
    %10 = vector.shape_cast %9 : vector<256x32xf32> to vector<8x32x32xf32>
    %11 = vector.extract_strided_slice %10 {offsets = [0, 0, 0], sizes = [8, 1, 32], strides = [1, 1, 1]} : vector<8x32x32xf32> to vector<8x1x32xf32>
    %12 = vector.shape_cast %11 : vector<8x1x32xf32> to vector<8x32xf32>
    %13 = vector.extract_strided_slice %10 {offsets = [0, 1, 0], sizes = [8, 1, 32], strides = [1, 1, 1]} : vector<8x32x32xf32> to vector<8x1x32xf32>
    %14 = vector.shape_cast %13 : vector<8x1x32xf32> to vector<8x32xf32>
    %15 = vector.extract_strided_slice %10 {offsets = [0, 2, 0], sizes = [8, 1, 32], strides = [1, 1, 1]} : vector<8x32x32xf32> to vector<8x1x32xf32>
    %16 = vector.shape_cast %15 : vector<8x1x32xf32> to vector<8x32xf32>
    %17 = vector.extract_strided_slice %10 {offsets = [0, 3, 0], sizes = [8, 1, 32], strides = [1, 1, 1]} : vector<8x32x32xf32> to vector<8x1x32xf32>
    %18 = vector.shape_cast %17 : vector<8x1x32xf32> to vector<8x32xf32>
    %19 = tpu.concatenate %12, %14, %16, %18 in 1 : vector<8x32xf32>, vector<8x32xf32>, vector<8x32xf32>, vector<8x32xf32> -> vector<8x128xf32>
    %c0_7 = arith.constant 0 : index
    %c0_8 = arith.constant 0 : index
    %20 = vector.load %arg4[%c0_7, %c0_8] : memref<8x1024xf32, #tpu.memory_space<vmem>>, vector<8x128xf32>
    tpu.vector_store %arg4[%c0_7, %c0_8], %19 {strides = array<i32>} : memref<8x1024xf32, #tpu.memory_space<vmem>>, vector<8x128xf32>,
    %21 = vector.extract_strided_slice %10 {offsets = [0, 4, 0], sizes = [8, 1, 32], strides = [1, 1, 1]} : vector<8x32x32xf32> to vector<8x1x32xf32>
    %22 = vector.shape_cast %21 : vector<8x1x32xf32> to vector<8x32xf32>
    %23 = vector.extract_strided_slice %10 {offsets = [0, 5, 0], sizes = [8, 1, 32], strides = [1, 1, 1]} : vector<8x32x32xf32> to vector<8x1x32xf32>
    %24 = vector.shape_cast %23 : vector<8x1x32xf32> to vector<8x32xf32>
    %25 = vector.extract_strided_slice %10 {offsets = [0, 6, 0], sizes = [8, 1, 32], strides = [1, 1, 1]} : vector<8x32x32xf32> to vector<8x1x32xf32>
    %26 = vector.shape_cast %25 : vector<8x1x32xf32> to vector<8x32xf32>
    %27 = vector.extract_strided_slice %10 {offsets = [0, 7, 0], sizes = [8, 1, 32], strides = [1, 1, 1]} : vector<8x32x32xf32> to vector<8x1x32xf32>
    %28 = vector.shape_cast %27 : vector<8x1x32xf32> to vector<8x32xf32>
    %29 = tpu.concatenate %22, %24, %26, %28 in 1 : vector<8x32xf32>, vector<8x32xf32>, vector<8x32xf32>, vector<8x32xf32> -> vector<8x128xf32>
    %c0_9 = arith.constant 0 : index
    %c128 = arith.constant 128 : index
    %30 = vector.load %arg4[%c0_9, %c128] : memref<8x1024xf32, #tpu.memory_space<vmem>>, vector<8x128xf32>
    tpu.vector_store %arg4[%c0_9, %c128], %29 {strides = array<i32>} : memref<8x1024xf32, #tpu.memory_space<vmem>>, vector<8x128xf32>,
    %31 = vector.extract_strided_slice %10 {offsets = [0, 8, 0], sizes = [8, 1, 32], strides = [1, 1, 1]} : vector<8x32x32xf32> to vector<8x1x32xf32>
    %32 = vector.shape_cast %31 : vector<8x1x32xf32> to vector<8x32xf32>
    %33 = vector.extract_strided_slice %10 {offsets = [0, 9, 0], sizes = [8, 1, 32], strides = [1, 1, 1]} : vector<8x32x32xf32> to vector<8x1x32xf32>
    %34 = vector.shape_cast %33 : vector<8x1x32xf32> to vector<8x32xf32>
    %35 = vector.extract_strided_slice %10 {offsets = [0, 10, 0], sizes = [8, 1, 32], strides = [1, 1, 1]} : vector<8x32x32xf32> to vector<8x1x32xf32>
    %36 = vector.shape_cast %35 : vector<8x1x32xf32> to vector<8x32xf32>
    %37 = vector.extract_strided_slice %10 {offsets = [0, 11, 0], sizes = [8, 1, 32], strides = [1, 1, 1]} : vector<8x32x32xf32> to vector<8x1x32xf32>
    %38 = vector.shape_cast %37 : vector<8x1x32xf32> to vector<8x32xf32>
    %39 = tpu.concatenate %32, %34, %36, %38 in 1 : vector<8x32xf32>, vector<8x32xf32>, vector<8x32xf32>, vector<8x32xf32> -> vector<8x128xf32>
    %c0_10 = arith.constant 0 : index
    %c256 = arith.constant 256 : index
    %40 = vector.load %arg4[%c0_10, %c256] : memref<8x1024xf32, #tpu.memory_space<vmem>>, vector<8x128xf32>
    tpu.vector_store %arg4[%c0_10, %c256], %39 {strides = array<i32>} : memref<8x1024xf32, #tpu.memory_space<vmem>>, vector<8x128xf32>,
    %41 = vector.extract_strided_slice %10 {offsets = [0, 12, 0], sizes = [8, 1, 32], strides = [1, 1, 1]} : vector<8x32x32xf32> to vector<8x1x32xf32>
    %42 = vector.shape_cast %41 : vector<8x1x32xf32> to vector<8x32xf32>
    %43 = vector.extract_strided_slice %10 {offsets = [0, 13, 0], sizes = [8, 1, 32], strides = [1, 1, 1]} : vector<8x32x32xf32> to vector<8x1x32xf32>
    %44 = vector.shape_cast %43 : vector<8x1x32xf32> to vector<8x32xf32>
    %45 = vector.extract_strided_slice %10 {offsets = [0, 14, 0], sizes = [8, 1, 32], strides = [1, 1, 1]} : vector<8x32x32xf32> to vector<8x1x32xf32>
    %46 = vector.shape_cast %45 : vector<8x1x32xf32> to vector<8x32xf32>
    %47 = vector.extract_strided_slice %10 {offsets = [0, 15, 0], sizes = [8, 1, 32], strides = [1, 1, 1]} : vector<8x32x32xf32> to vector<8x1x32xf32>
    %48 = vector.shape_cast %47 : vector<8x1x32xf32> to vector<8x32xf32>
    %49 = tpu.concatenate %42, %44, %46, %48 in 1 : vector<8x32xf32>, vector<8x32xf32>, vector<8x32xf32>, vector<8x32xf32> -> vector<8x128xf32>
    %c0_11 = arith.constant 0 : index
    %c384 = arith.constant 384 : index
    %50 = vector.load %arg4[%c0_11, %c384] : memref<8x1024xf32, #tpu.memory_space<vmem>>, vector<8x128xf32>
    tpu.vector_store %arg4[%c0_11, %c384], %49 {strides = array<i32>} : memref<8x1024xf32, #tpu.memory_space<vmem>>, vector<8x128xf32>,
    %51 = vector.extract_strided_slice %10 {offsets = [0, 16, 0], sizes = [8, 1, 32], strides = [1, 1, 1]} : vector<8x32x32xf32> to vector<8x1x32xf32>
    %52 = vector.shape_cast %51 : vector<8x1x32xf32> to vector<8x32xf32>
    %53 = vector.extract_strided_slice %10 {offsets = [0, 17, 0], sizes = [8, 1, 32], strides = [1, 1, 1]} : vector<8x32x32xf32> to vector<8x1x32xf32>
    %54 = vector.shape_cast %53 : vector<8x1x32xf32> to vector<8x32xf32>
    %55 = vector.extract_strided_slice %10 {offsets = [0, 18, 0], sizes = [8, 1, 32], strides = [1, 1, 1]} : vector<8x32x32xf32> to vector<8x1x32xf32>
    %56 = vector.shape_cast %55 : vector<8x1x32xf32> to vector<8x32xf32>
    %57 = vector.extract_strided_slice %10 {offsets = [0, 19, 0], sizes = [8, 1, 32], strides = [1, 1, 1]} : vector<8x32x32xf32> to vector<8x1x32xf32>
    %58 = vector.shape_cast %57 : vector<8x1x32xf32> to vector<8x32xf32>
    %59 = tpu.concatenate %52, %54, %56, %58 in 1 : vector<8x32xf32>, vector<8x32xf32>, vector<8x32xf32>, vector<8x32xf32> -> vector<8x128xf32>
    %c0_12 = arith.constant 0 : index
    %c512 = arith.constant 512 : index
    %60 = vector.load %arg4[%c0_12, %c512] : memref<8x1024xf32, #tpu.memory_space<vmem>>, vector<8x128xf32>
    tpu.vector_store %arg4[%c0_12, %c512], %59 {strides = array<i32>} : memref<8x1024xf32, #tpu.memory_space<vmem>>, vector<8x128xf32>,
    %61 = vector.extract_strided_slice %10 {offsets = [0, 20, 0], sizes = [8, 1, 32], strides = [1, 1, 1]} : vector<8x32x32xf32> to vector<8x1x32xf32>
    %62 = vector.shape_cast %61 : vector<8x1x32xf32> to vector<8x32xf32>
    %63 = vector.extract_strided_slice %10 {offsets = [0, 21, 0], sizes = [8, 1, 32], strides = [1, 1, 1]} : vector<8x32x32xf32> to vector<8x1x32xf32>
    %64 = vector.shape_cast %63 : vector<8x1x32xf32> to vector<8x32xf32>
    %65 = vector.extract_strided_slice %10 {offsets = [0, 22, 0], sizes = [8, 1, 32], strides = [1, 1, 1]} : vector<8x32x32xf32> to vector<8x1x32xf32>
    %66 = vector.shape_cast %65 : vector<8x1x32xf32> to vector<8x32xf32>
    %67 = vector.extract_strided_slice %10 {offsets = [0, 23, 0], sizes = [8, 1, 32], strides = [1, 1, 1]} : vector<8x32x32xf32> to vector<8x1x32xf32>
    %68 = vector.shape_cast %67 : vector<8x1x32xf32> to vector<8x32xf32>
    %69 = tpu.concatenate %62, %64, %66, %68 in 1 : vector<8x32xf32>, vector<8x32xf32>, vector<8x32xf32>, vector<8x32xf32> -> vector<8x128xf32>
    %c0_13 = arith.constant 0 : index
    %c640 = arith.constant 640 : index
    %70 = vector.load %arg4[%c0_13, %c640] : memref<8x1024xf32, #tpu.memory_space<vmem>>, vector<8x128xf32>
    tpu.vector_store %arg4[%c0_13, %c640], %69 {strides = array<i32>} : memref<8x1024xf32, #tpu.memory_space<vmem>>, vector<8x128xf32>,
    %71 = vector.extract_strided_slice %10 {offsets = [0, 24, 0], sizes = [8, 1, 32], strides = [1, 1, 1]} : vector<8x32x32xf32> to vector<8x1x32xf32>
    %72 = vector.shape_cast %71 : vector<8x1x32xf32> to vector<8x32xf32>
    %73 = vector.extract_strided_slice %10 {offsets = [0, 25, 0], sizes = [8, 1, 32], strides = [1, 1, 1]} : vector<8x32x32xf32> to vector<8x1x32xf32>
    %74 = vector.shape_cast %73 : vector<8x1x32xf32> to vector<8x32xf32>
    %75 = vector.extract_strided_slice %10 {offsets = [0, 26, 0], sizes = [8, 1, 32], strides = [1, 1, 1]} : vector<8x32x32xf32> to vector<8x1x32xf32>
    %76 = vector.shape_cast %75 : vector<8x1x32xf32> to vector<8x32xf32>
    %77 = vector.extract_strided_slice %10 {offsets = [0, 27, 0], sizes = [8, 1, 32], strides = [1, 1, 1]} : vector<8x32x32xf32> to vector<8x1x32xf32>
    %78 = vector.shape_cast %77 : vector<8x1x32xf32> to vector<8x32xf32>
    %79 = tpu.concatenate %72, %74, %76, %78 in 1 : vector<8x32xf32>, vector<8x32xf32>, vector<8x32xf32>, vector<8x32xf32> -> vector<8x128xf32>
    %c0_14 = arith.constant 0 : index
    %c768 = arith.constant 768 : index
    %80 = vector.load %arg4[%c0_14, %c768] : memref<8x1024xf32, #tpu.memory_space<vmem>>, vector<8x128xf32>
    tpu.vector_store %arg4[%c0_14, %c768], %79 {strides = array<i32>} : memref<8x1024xf32, #tpu.memory_space<vmem>>, vector<8x128xf32>,
    %81 = vector.extract_strided_slice %10 {offsets = [0, 28, 0], sizes = [8, 1, 32], strides = [1, 1, 1]} : vector<8x32x32xf32> to vector<8x1x32xf32>
    %82 = vector.shape_cast %81 : vector<8x1x32xf32> to vector<8x32xf32>
    %83 = vector.extract_strided_slice %10 {offsets = [0, 29, 0], sizes = [8, 1, 32], strides = [1, 1, 1]} : vector<8x32x32xf32> to vector<8x1x32xf32>
    %84 = vector.shape_cast %83 : vector<8x1x32xf32> to vector<8x32xf32>
    %85 = vector.extract_strided_slice %10 {offsets = [0, 30, 0], sizes = [8, 1, 32], strides = [1, 1, 1]} : vector<8x32x32xf32> to vector<8x1x32xf32>
    %86 = vector.shape_cast %85 : vector<8x1x32xf32> to vector<8x32xf32>
    %87 = vector.extract_strided_slice %10 {offsets = [0, 31, 0], sizes = [8, 1, 32], strides = [1, 1, 1]} : vector<8x32x32xf32> to vector<8x1x32xf32>
    %88 = vector.shape_cast %87 : vector<8x1x32xf32> to vector<8x32xf32>
    %89 = tpu.concatenate %82, %84, %86, %88 in 1 : vector<8x32xf32>, vector<8x32xf32>, vector<8x32xf32>, vector<8x32xf32> -> vector<8x128xf32>
    %c0_15 = arith.constant 0 : index
    %c896 = arith.constant 896 : index
    %90 = vector.load %arg4[%c0_15, %c896] : memref<8x1024xf32, #tpu.memory_space<vmem>>, vector<8x128xf32>
    tpu.vector_store %arg4[%c0_15, %c896], %89 {strides = array<i32>} : memref<8x1024xf32, #tpu.memory_space<vmem>>, vector<8x128xf32>,
    return
  }
  func.func @transform_0(%arg0: i32) -> (i32, i32, i32) {
    %c0_i32 = arith.constant 0 : i32
    %c0_i32_0 = arith.constant 0 : i32
    %c0_i32_1 = arith.constant 0 : i32
    return %arg0, %c0_i32, %c0_i32_0 : i32, i32, i32
  }
  func.func @transform_1(%arg0: i32) -> (i32, i32) {
    %c0_i32 = arith.constant 0 : i32
    %c0_i32_0 = arith.constant 0 : i32
    %c0_i32_1 = arith.constant 0 : i32
    return %c0_i32, %c0_i32_0 : i32, i32
  }
  func.func @transform_2(%arg0: i32) -> (i32, i32) {
    %c0_i32 = arith.constant 0 : i32
    %c0_i32_0 = arith.constant 0 : i32
    %c0_i32_1 = arith.constant 0 : i32
    return %c0_i32, %c0_i32_0 : i32, i32
  }
  func.func @transform_3(%arg0: i32) -> (i32, i32) {
    %c0_i32 = arith.constant 0 : i32
    %c0_i32_0 = arith.constant 0 : i32
    return %arg0, %c0_i32 : i32, i32
  }
}

</mosaic_0001>

<llo_original>
// kernel: tpu_custom_call.1
$region0: #{tpu_custom_call.1}
  #allocation0 [shape = 'u32[]', space=smem, size = 0x4, offset = 0x4, fixed_abs, tag = 'smem constant byte address 0x4 - core index']
  #allocation1 [shape = 'u32[144,128]{1,0:T(1,128)}', space=vmem, size = 0x12000, scoped, tag = 'internal scratch']
  %s0 = inlined_call_operand.hbm [shape: f32[8,16,16], index: 0, kind: input, shape index: {}]
  %s1 = inlined_call_operand.hbm [shape: f32[16,32], index: 1, kind: input, shape index: {}]
  %s2 = inlined_call_operand.hbm [shape: f32[16,32], index: 2, kind: input, shape index: {}]
  %s3 = inlined_call_operand.hbm [shape: f32[8,1024], index: 3, kind: output, shape index: {}]
  %s4 = sld [smem:[#allocation0]]
  $region34: #{tpu_custom_call.1} parent=0
    _
  %s6 = ssub.s32 1, %s4
  %s7 = scalar_select 0, %s6, %s4
  $region1: #{tpu_custom_call.1} parent=0
    #allocation2 [shape = 'u8[65536]{0}', space=vmem, size = 0x10000, scoped, tag = 'input window, operand 0, single buffered']
    #allocation3 [shape = 's32[1]{0}', space=sflag, size = 0x4, scoped, tag = 'scoped memory for tpu_custom_call.1']
    #allocation4 [shape = 's32[1]{0}', space=sflag, size = 0x4, scoped, tag = 'scoped memory for tpu_custom_call.1']
    #allocation5 [shape = 'u8[8192]{0}', space=vmem, size = 0x2000, scoped, tag = 'input window, operand 1, single buffered']
    #allocation6 [shape = 's32[1]{0}', space=sflag, size = 0x4, scoped, tag = 'scoped memory for tpu_custom_call.1']
    #allocation7 [shape = 'u8[8192]{0}', space=vmem, size = 0x2000, scoped, tag = 'input window, operand 2, single buffered']
    #allocation8 [shape = 'u8[32768]{0}', space=vmem, size = 0x8000, scoped, tag = 'output window, operand 0, single buffered']
    %8 = vsyncpa [#allocation3], 0
    %9 = vsyncpa [#allocation6], 0
    %10 = vsyncpa [#allocation4], 0
    // Predicated region
    $region2: #{tpu_custom_call.1} parent=1 // pred_check
      _
    $region3: #{tpu_custom_call.1} parent=1 // pred_check_branch
      %12 = sbr.rel (0) target = $region5
    $region4: #{tpu_custom_call.1} parent=1 // pred_region
      %s14 = ssub.s32 2048, 2048
      %15 = vsyncadd [#allocation3], %s14
      %s16 = sshll.u32 [#allocation2], 4
      %s17 = int_to_ptr.vmem [resolvable:$true] %s16
      %22 = dma.hbm_to_vmem [thread:$0]  %s0, 2048, %s17, [#allocation3], 128, 128, 8
    $region5: #{tpu_custom_call.1} parent=1 // pred_fallthru
      _
    // Predicated region
    $region6: #{tpu_custom_call.1} parent=1 // pred_check
      _
    $region7: #{tpu_custom_call.1} parent=1 // pred_check_branch
      %24 = sbr.rel (0) target = $region9
    $region8: #{tpu_custom_call.1} parent=1 // pred_region
      %s26 = ssub.s32 256, 256
      %27 = vsyncadd [#allocation6], %s26
      %s28 = sshll.u32 [#allocation5], 4
      %s29 = int_to_ptr.vmem [resolvable:$true] %s28
      %34 = dma.hbm_to_vmem [thread:$0]  %s1, 256, %s29, [#allocation6], 128, 128, 8
    $region9: #{tpu_custom_call.1} parent=1 // pred_fallthru
      _
    // Predicated region
    $region10: #{tpu_custom_call.1} parent=1 // pred_check
      _
    $region11: #{tpu_custom_call.1} parent=1 // pred_check_branch
      %36 = sbr.rel (0) target = $region13
    $region12: #{tpu_custom_call.1} parent=1 // pred_region
      %s38 = ssub.s32 256, 256
      %39 = vsyncadd [#allocation6], %s38
      %s40 = sshll.u32 [#allocation7], 4
      %s41 = int_to_ptr.vmem [resolvable:$true] %s40
      %46 = dma.hbm_to_vmem [thread:$0]  %s2, 256, %s41, [#allocation6], 128, 128, 8
    $region13: #{tpu_custom_call.1} parent=1 // pred_fallthru
      _
    // Predicated region
    $region14: #{tpu_custom_call.1} parent=1 // pred_check
      _
    $region15: #{tpu_custom_call.1} parent=1 // pred_check_branch
      %48 = sbr.rel (0) target = $region17
    $region16: #{tpu_custom_call.1} parent=1 // pred_region
      %49 = dma.done [#allocation3], 2048
    $region17: #{tpu_custom_call.1} parent=1 // pred_fallthru
      _
    // Predicated region
    $region18: #{tpu_custom_call.1} parent=1 // pred_check
      _
    $region19: #{tpu_custom_call.1} parent=1 // pred_check_branch
      %51 = sbr.rel (0) target = $region21
    $region20: #{tpu_custom_call.1} parent=1 // pred_region
      %52 = dma.done [#allocation6], 256
    $region21: #{tpu_custom_call.1} parent=1 // pred_fallthru
      _
    // Predicated region
    $region22: #{tpu_custom_call.1} parent=1 // pred_check
      _
    $region23: #{tpu_custom_call.1} parent=1 // pred_check_branch
      %54 = sbr.rel (0) target = $region25
    $region24: #{tpu_custom_call.1} parent=1 // pred_region
      %55 = dma.done [#allocation6], 256
    $region25: #{tpu_custom_call.1} parent=1 // pred_fallthru
      _
    %v56 = vld [vmem:[#allocation2] sm:$0xff]
    %v57 = vld [vmem:[#allocation2 + $0x8] sm:$0xff]
    %v58 = vld [vmem:[#allocation2 + $0x10] sm:$0xff]
    %v59 = vld [vmem:[#allocation2 + $0x18] sm:$0xff]
    %v60 = vld [vmem:[#allocation2 + $0x20] sm:$0xff]
    %v61 = vld [vmem:[#allocation2 + $0x28] sm:$0xff]
    %v62 = vld [vmem:[#allocation2 + $0x30] sm:$0xff]
    %v63 = vld [vmem:[#allocation2 + $0x38] sm:$0xff]
    %v64 = vld [vmem:[#allocation2 + $0x40] sm:$0xff]
    %v65 = vld [vmem:[#allocation2 + $0x48] sm:$0xff]
    %v66 = vld [vmem:[#allocation2 + $0x50] sm:$0xff]
    %v67 = vld [vmem:[#allocation2 + $0x58] sm:$0xff]
    %v68 = vld [vmem:[#allocation2 + $0x60] sm:$0xff]
    %v69 = vld [vmem:[#allocation2 + $0x68] sm:$0xff]
    %v70 = vld [vmem:[#allocation2 + $0x70] sm:$0xff]
    %v71 = vld [vmem:[#allocation2 + $0x78] sm:$0xff]
    %72 = vxpose.xlu0.b32.start [1/16] %v56, 128
    %73 = vxpose.xlu0.b32.cont [2/16] %v57, 128
    %74 = vxpose.xlu0.b32.cont [3/16] 0.0, 128
    %75 = vxpose.xlu0.b32.cont [4/16] 0.0, 128
    %76 = vxpose.xlu0.b32.cont [5/16] 0.0, 128
    %77 = vxpose.xlu0.b32.cont [6/16] 0.0, 128
    %78 = vxpose.xlu0.b32.cont [7/16] 0.0, 128
    %79 = vxpose.xlu0.b32.cont [8/16] 0.0, 128
    %80 = vxpose.xlu0.b32.cont [9/16] 0.0, 128
    %81 = vxpose.xlu0.b32.cont [10/16] 0.0, 128
    %82 = vxpose.xlu0.b32.cont [11/16] 0.0, 128
    %83 = vxpose.xlu0.b32.cont [12/16] 0.0, 128
    %84 = vxpose.xlu0.b32.cont [13/16] 0.0, 128
    %85 = vxpose.xlu0.b32.cont [14/16] 0.0, 128
    %86 = vxpose.xlu0.b32.cont [15/16] 0.0, 128
    %87 = vxpose.xlu0.b32.end [16/16] 0.0, 128
    %v88 = vpop.trf.xlu0
    %v89 = vpop.trf.xlu0
    %v90 = vpop.trf.xlu0
    %v91 = vpop.trf.xlu0
    %v92 = vpop.trf.xlu0
    %v93 = vpop.trf.xlu0
    %v94 = vpop.trf.xlu0
    %v95 = vpop.trf.xlu0
    %v96 = vpop.trf.xlu0
    %v97 = vpop.trf.xlu0
    %v98 = vpop.trf.xlu0
    %v99 = vpop.trf.xlu0
    %v100 = vpop.trf.xlu0
    %v101 = vpop.trf.xlu0
    %v102 = vpop.trf.xlu0
    %v103 = vpop.trf.xlu0
    %104 = vxpose.xlu0.b32.start [1/16] %v58, 128
    %105 = vxpose.xlu0.b32.cont [2/16] %v59, 128
    %106 = vxpose.xlu0.b32.cont [3/16] 0.0, 128
    %107 = vxpose.xlu0.b32.cont [4/16] 0.0, 128
    %108 = vxpose.xlu0.b32.cont [5/16] 0.0, 128
    %109 = vxpose.xlu0.b32.cont [6/16] 0.0, 128
    %110 = vxpose.xlu0.b32.cont [7/16] 0.0, 128
    %111 = vxpose.xlu0.b32.cont [8/16] 0.0, 128
    %112 = vxpose.xlu0.b32.cont [9/16] 0.0, 128
    %113 = vxpose.xlu0.b32.cont [10/16] 0.0, 128
    %114 = vxpose.xlu0.b32.cont [11/16] 0.0, 128
    %115 = vxpose.xlu0.b32.cont [12/16] 0.0, 128
    %116 = vxpose.xlu0.b32.cont [13/16] 0.0, 128
    %117 = vxpose.xlu0.b32.cont [14/16] 0.0, 128
    %118 = vxpose.xlu0.b32.cont [15/16] 0.0, 128
    %119 = vxpose.xlu0.b32.end [16/16] 0.0, 128
    %v120 = vpop.trf.xlu0
    %v121 = vpop.trf.xlu0
    %v122 = vpop.trf.xlu0
    %v123 = vpop.trf.xlu0
    %v124 = vpop.trf.xlu0
    %v125 = vpop.trf.xlu0
    %v126 = vpop.trf.xlu0
    %v127 = vpop.trf.xlu0
    %v128 = vpop.trf.xlu0
    %v129 = vpop.trf.xlu0
    %v130 = vpop.trf.xlu0
    %v131 = vpop.trf.xlu0
    %v132 = vpop.trf.xlu0
    %v133 = vpop.trf.xlu0
    %v134 = vpop.trf.xlu0
    %v135 = vpop.trf.xlu0
    %136 = vxpose.xlu0.b32.start [1/16] %v60, 128
    %137 = vxpose.xlu0.b32.cont [2/16] %v61, 128
    %138 = vxpose.xlu0.b32.cont [3/16] 0.0, 128
    %139 = vxpose.xlu0.b32.cont [4/16] 0.0, 128
    %140 = vxpose.xlu0.b32.cont [5/16] 0.0, 128
    %141 = vxpose.xlu0.b32.cont [6/16] 0.0, 128
    %142 = vxpose.xlu0.b32.cont [7/16] 0.0, 128
    %143 = vxpose.xlu0.b32.cont [8/16] 0.0, 128
    %144 = vxpose.xlu0.b32.cont [9/16] 0.0, 128
    %145 = vxpose.xlu0.b32.cont [10/16] 0.0, 128
    %146 = vxpose.xlu0.b32.cont [11/16] 0.0, 128
    %147 = vxpose.xlu0.b32.cont [12/16] 0.0, 128
    %148 = vxpose.xlu0.b32.cont [13/16] 0.0, 128
    %149 = vxpose.xlu0.b32.cont [14/16] 0.0, 128
    %150 = vxpose.xlu0.b32.cont [15/16] 0.0, 128
    %151 = vxpose.xlu0.b32.end [16/16] 0.0, 128
    %v152 = vpop.trf.xlu0
    %v153 = vpop.trf.xlu0
    %v154 = vpop.trf.xlu0
    %v155 = vpop.trf.xlu0
    %v156 = vpop.trf.xlu0
    %v157 = vpop.trf.xlu0
    %v158 = vpop.trf.xlu0
    %v159 = vpop.trf.xlu0
    %v160 = vpop.trf.xlu0
    %v161 = vpop.trf.xlu0
    %v162 = vpop.trf.xlu0
    %v163 = vpop.trf.xlu0
    %v164 = vpop.trf.xlu0
    %v165 = vpop.trf.xlu0
    %v166 = vpop.trf.xlu0
    %v167 = vpop.trf.xlu0
    %168 = vxpose.xlu0.b32.start [1/16] %v62, 128
    %169 = vxpose.xlu0.b32.cont [2/16] %v63, 128
    %170 = vxpose.xlu0.b32.cont [3/16] 0.0, 128
    %171 = vxpose.xlu0.b32.cont [4/16] 0.0, 128
    %172 = vxpose.xlu0.b32.cont [5/16] 0.0, 128
    %173 = vxpose.xlu0.b32.cont [6/16] 0.0, 128
    %174 = vxpose.xlu0.b32.cont [7/16] 0.0, 128
    %175 = vxpose.xlu0.b32.cont [8/16] 0.0, 128
    %176 = vxpose.xlu0.b32.cont [9/16] 0.0, 128
    %177 = vxpose.xlu0.b32.cont [10/16] 0.0, 128
    %178 = vxpose.xlu0.b32.cont [11/16] 0.0, 128
    %179 = vxpose.xlu0.b32.cont [12/16] 0.0, 128
    %180 = vxpose.xlu0.b32.cont [13/16] 0.0, 128
    %181 = vxpose.xlu0.b32.cont [14/16] 0.0, 128
    %182 = vxpose.xlu0.b32.cont [15/16] 0.0, 128
    %183 = vxpose.xlu0.b32.end [16/16] 0.0, 128
    %v184 = vpop.trf.xlu0
    %v185 = vpop.trf.xlu0
    %v186 = vpop.trf.xlu0
    %v187 = vpop.trf.xlu0
    %v188 = vpop.trf.xlu0
    %v189 = vpop.trf.xlu0
    %v190 = vpop.trf.xlu0
    %v191 = vpop.trf.xlu0
    %v192 = vpop.trf.xlu0
    %v193 = vpop.trf.xlu0
    %v194 = vpop.trf.xlu0
    %v195 = vpop.trf.xlu0
    %v196 = vpop.trf.xlu0
    %v197 = vpop.trf.xlu0
    %v198 = vpop.trf.xlu0
    %v199 = vpop.trf.xlu0
    %200 = vxpose.xlu0.b32.start [1/16] %v64, 128
    %201 = vxpose.xlu0.b32.cont [2/16] %v65, 128
    %202 = vxpose.xlu0.b32.cont [3/16] 0.0, 128
    %203 = vxpose.xlu0.b32.cont [4/16] 0.0, 128
    %204 = vxpose.xlu0.b32.cont [5/16] 0.0, 128
    %205 = vxpose.xlu0.b32.cont [6/16] 0.0, 128
    %206 = vxpose.xlu0.b32.cont [7/16] 0.0, 128
    %207 = vxpose.xlu0.b32.cont [8/16] 0.0, 128
    %208 = vxpose.xlu0.b32.cont [9/16] 0.0, 128
    %209 = vxpose.xlu0.b32.cont [10/16] 0.0, 128
    %210 = vxpose.xlu0.b32.cont [11/16] 0.0, 128
    %211 = vxpose.xlu0.b32.cont [12/16] 0.0, 128
    %212 = vxpose.xlu0.b32.cont [13/16] 0.0, 128
    %213 = vxpose.xlu0.b32.cont [14/16] 0.0, 128
    %214 = vxpose.xlu0.b32.cont [15/16] 0.0, 128
    %215 = vxpose.xlu0.b32.end [16/16] 0.0, 128
    %v216 = vpop.trf.xlu0
    %v217 = vpop.trf.xlu0
    %v218 = vpop.trf.xlu0
    %v219 = vpop.trf.xlu0
    %v220 = vpop.trf.xlu0
    %v221 = vpop.trf.xlu0
    %v222 = vpop.trf.xlu0
    %v223 = vpop.trf.xlu0
    %v224 = vpop.trf.xlu0
    %v225 = vpop.trf.xlu0
    %v226 = vpop.trf.xlu0
    %v227 = vpop.trf.xlu0
    %v228 = vpop.trf.xlu0
    %v229 = vpop.trf.xlu0
    %v230 = vpop.trf.xlu0
    %v231 = vpop.trf.xlu0
    %232 = vxpose.xlu0.b32.start [1/16] %v66, 128
    %233 = vxpose.xlu0.b32.cont [2/16] %v67, 128
    %234 = vxpose.xlu0.b32.cont [3/16] 0.0, 128
    %235 = vxpose.xlu0.b32.cont [4/16] 0.0, 128
    %236 = vxpose.xlu0.b32.cont [5/16] 0.0, 128
    %237 = vxpose.xlu0.b32.cont [6/16] 0.0, 128
    %238 = vxpose.xlu0.b32.cont [7/16] 0.0, 128
    %239 = vxpose.xlu0.b32.cont [8/16] 0.0, 128
    %240 = vxpose.xlu0.b32.cont [9/16] 0.0, 128
    %241 = vxpose.xlu0.b32.cont [10/16] 0.0, 128
    %242 = vxpose.xlu0.b32.cont [11/16] 0.0, 128
    %243 = vxpose.xlu0.b32.cont [12/16] 0.0, 128
    %244 = vxpose.xlu0.b32.cont [13/16] 0.0, 128
    %245 = vxpose.xlu0.b32.cont [14/16] 0.0, 128
    %246 = vxpose.xlu0.b32.cont [15/16] 0.0, 128
    %247 = vxpose.xlu0.b32.end [16/16] 0.0, 128
    %v248 = vpop.trf.xlu0
    %v249 = vpop.trf.xlu0
    %v250 = vpop.trf.xlu0
    %v251 = vpop.trf.xlu0
    %v252 = vpop.trf.xlu0
    %v253 = vpop.trf.xlu0
    %v254 = vpop.trf.xlu0
    %v255 = vpop.trf.xlu0
    %v256 = vpop.trf.xlu0
    %v257 = vpop.trf.xlu0
    %v258 = vpop.trf.xlu0
    %v259 = vpop.trf.xlu0
    %v260 = vpop.trf.xlu0
    %v261 = vpop.trf.xlu0
    %v262 = vpop.trf.xlu0
    %v263 = vpop.trf.xlu0
    %264 = vxpose.xlu0.b32.start [1/16] %v68, 128
    %265 = vxpose.xlu0.b32.cont [2/16] %v69, 128
    %266 = vxpose.xlu0.b32.cont [3/16] 0.0, 128
    %267 = vxpose.xlu0.b32.cont [4/16] 0.0, 128
    %268 = vxpose.xlu0.b32.cont [5/16] 0.0, 128
    %269 = vxpose.xlu0.b32.cont [6/16] 0.0, 128
    %270 = vxpose.xlu0.b32.cont [7/16] 0.0, 128
    %271 = vxpose.xlu0.b32.cont [8/16] 0.0, 128
    %272 = vxpose.xlu0.b32.cont [9/16] 0.0, 128
    %273 = vxpose.xlu0.b32.cont [10/16] 0.0, 128
    %274 = vxpose.xlu0.b32.cont [11/16] 0.0, 128
    %275 = vxpose.xlu0.b32.cont [12/16] 0.0, 128
    %276 = vxpose.xlu0.b32.cont [13/16] 0.0, 128
    %277 = vxpose.xlu0.b32.cont [14/16] 0.0, 128
    %278 = vxpose.xlu0.b32.cont [15/16] 0.0, 128
    %279 = vxpose.xlu0.b32.end [16/16] 0.0, 128
    %v280 = vpop.trf.xlu0
    %v281 = vpop.trf.xlu0
    %v282 = vpop.trf.xlu0
    %v283 = vpop.trf.xlu0
    %v284 = vpop.trf.xlu0
    %v285 = vpop.trf.xlu0
    %v286 = vpop.trf.xlu0
    %v287 = vpop.trf.xlu0
    %v288 = vpop.trf.xlu0
    %v289 = vpop.trf.xlu0
    %v290 = vpop.trf.xlu0
    %v291 = vpop.trf.xlu0
    %v292 = vpop.trf.xlu0
    %v293 = vpop.trf.xlu0
    %v294 = vpop.trf.xlu0
    %v295 = vpop.trf.xlu0
    %296 = vxpose.xlu0.b32.start [1/16] %v70, 128
    %297 = vxpose.xlu0.b32.cont [2/16] %v71, 128
    %298 = vxpose.xlu0.b32.cont [3/16] 0.0, 128
    %299 = vxpose.xlu0.b32.cont [4/16] 0.0, 128
    %300 = vxpose.xlu0.b32.cont [5/16] 0.0, 128
    %301 = vxpose.xlu0.b32.cont [6/16] 0.0, 128
    %302 = vxpose.xlu0.b32.cont [7/16] 0.0, 128
    %303 = vxpose.xlu0.b32.cont [8/16] 0.0, 128
    %304 = vxpose.xlu0.b32.cont [9/16] 0.0, 128
    %305 = vxpose.xlu0.b32.cont [10/16] 0.0, 128
    %306 = vxpose.xlu0.b32.cont [11/16] 0.0, 128
    %307 = vxpose.xlu0.b32.cont [12/16] 0.0, 128
    %308 = vxpose.xlu0.b32.cont [13/16] 0.0, 128
    %309 = vxpose.xlu0.b32.cont [14/16] 0.0, 128
    %310 = vxpose.xlu0.b32.cont [15/16] 0.0, 128
    %311 = vxpose.xlu0.b32.end [16/16] 0.0, 128
    %v312 = vpop.trf.xlu0
    %v313 = vpop.trf.xlu0
    %v314 = vpop.trf.xlu0
    %v315 = vpop.trf.xlu0
    %v316 = vpop.trf.xlu0
    %v317 = vpop.trf.xlu0
    %v318 = vpop.trf.xlu0
    %v319 = vpop.trf.xlu0
    %v320 = vpop.trf.xlu0
    %v321 = vpop.trf.xlu0
    %v322 = vpop.trf.xlu0
    %v323 = vpop.trf.xlu0
    %v324 = vpop.trf.xlu0
    %v325 = vpop.trf.xlu0
    %v326 = vpop.trf.xlu0
    %v327 = vpop.trf.xlu0
    %v328 = vld [vmem:[#allocation5] sm:$0xff]
    %v329 = vld [vmem:[#allocation5 + $0x8] sm:$0xff]
    %vm330 = vcmask 130048
    %v332 = vsel %vm330, %v88, 0
    %v335 = vsel %vm330, %v89, 0
    %v338 = vsel %vm330, %v120, 0
    %v341 = vsel %vm330, %v121, 0
    %v344 = vsel %vm330, %v152, 0
    %v347 = vsel %vm330, %v153, 0
    %v350 = vsel %vm330, %v184, 0
    %v353 = vsel %vm330, %v185, 0
    %v356 = vsel %vm330, %v216, 0
    %v359 = vsel %vm330, %v217, 0
    %v362 = vsel %vm330, %v248, 0
    %v365 = vsel %vm330, %v249, 0
    %v368 = vsel %vm330, %v280, 0
    %v371 = vsel %vm330, %v281, 0
    %v374 = vsel %vm330, %v312, 0
    %v377 = vsel %vm330, %v313, 0
    %379 = vmatprep.subr.mxu0 0.0
    %380 = vmatpush1.msra.mxu0 %v328
    %381 = vmatprep.subr.mxu0 0.0
    %382 = vmatpush1.msra.mxu0 %v329
    %383 = vmatprep.subr.mxu0 0.0
    %384 = vmatpush1.msra.mxu0 0.0
    %385 = vmatprep.subr.mxu0 0.0
    %386 = vmatpush1.msra.mxu0 0.0
    %387 = vmatprep.subr.mxu0 0.0
    %388 = vmatpush1.msra.mxu0 0.0
    %389 = vmatprep.subr.mxu0 0.0
    %390 = vmatpush1.msra.mxu0 0.0
    %391 = vmatprep.subr.mxu0 0.0
    %392 = vmatpush1.msra.mxu0 0.0
    %393 = vmatprep.subr.mxu0 0.0
    %394 = vmatpush1.msra.mxu0 0.0
    %395 = vmatprep.subr.mxu0 0.0
    %396 = vmatpush1.msra.mxu0 0.0
    %397 = vmatprep.subr.mxu0 0.0
    %398 = vmatpush1.msra.mxu0 0.0
    %399 = vmatprep.subr.mxu0 0.0
    %400 = vmatpush1.msra.mxu0 0.0
    %401 = vmatprep.subr.mxu0 0.0
    %402 = vmatpush1.msra.mxu0 0.0
    %403 = vmatprep.subr.mxu0 0.0
    %404 = vmatpush1.msra.mxu0 0.0
    %405 = vmatprep.subr.mxu0 0.0
    %406 = vmatpush1.msra.mxu0 0.0
    %407 = vmatprep.subr.mxu0 0.0
    %408 = vmatpush1.msra.mxu0 0.0
    %409 = vmatprep.subr.mxu0 0.0
    %410 = vmatpush1.msra.mxu0 0.0
    %411 = vmatprep.subr.mxu0 0.0
    %412 = vmatpush1.msra.mxu0 0.0
    %413 = vmatprep.subr.mxu0 0.0
    %414 = vmatpush1.msra.mxu0 0.0
    %415 = vmatprep.subr.mxu0 0.0
    %416 = vmatpush1.msra.mxu0 0.0
    %417 = vmatprep.subr.mxu0 0.0
    %418 = vmatpush1.msra.mxu0 0.0
    %419 = vmatprep.subr.mxu0 0.0
    %420 = vmatpush1.msra.mxu0 0.0
    %421 = vmatprep.subr.mxu0 0.0
    %422 = vmatpush1.msra.mxu0 0.0
    %423 = vmatprep.subr.mxu0 0.0
    %424 = vmatpush1.msra.mxu0 0.0
    %425 = vmatprep.subr.mxu0 0.0
    %426 = vmatpush1.msra.mxu0 0.0
    %427 = vmatprep.subr.mxu0 0.0
    %428 = vmatpush1.msra.mxu0 0.0
    %429 = vmatprep.subr.mxu0 0.0
    %430 = vmatpush1.msra.mxu0 0.0
    %431 = vmatprep.subr.mxu0 0.0
    %432 = vmatpush1.msra.mxu0 0.0
    %433 = vmatprep.subr.mxu0 0.0
    %434 = vmatpush1.msra.mxu0 0.0
    %435 = vmatprep.subr.mxu0 0.0
    %436 = vmatpush1.msra.mxu0 0.0
    %437 = vmatprep.subr.mxu0 0.0
    %438 = vmatpush1.msra.mxu0 0.0
    %439 = vmatprep.subr.mxu0 0.0
    %440 = vmatpush1.msra.mxu0 0.0
    %441 = vmatprep.subr.mxu0 0.0
    %442 = vmatpush1.msra.mxu0 0.0
    %443 = vmatprep.mubr.f32.mxu0 0.0
    %444 = vmatmul.mubr.f32.gmra.mrb[0].mxu0 %v332
    %v445 = vpop.f32.mrb[0].mxu0
    %v446 = vadd.f32 0.0, %v445
    %v447 = vpop.f32.mrb[0].mxu0
    %448 = vmatprep.mubr.f32.mxu0 0.0
    %449 = vmatmul.mubr.f32.gmra.mrb[0].mxu0 %v335
    %v450 = vpop.f32.mrb[0].mxu0
    %v451 = vadd.f32 0.0, %v450
    %v452 = vpop.f32.mrb[0].mxu0
    %453 = vmatprep.mubr.f32.mxu0 0.0
    %454 = vmatmul.mubr.f32.gmra.mrb[0].mxu0 %v338
    %v455 = vpop.f32.mrb[0].mxu0
    %v456 = vadd.f32 0.0, %v455
    %v457 = vpop.f32.mrb[0].mxu0
    %458 = vmatprep.mubr.f32.mxu0 0.0
    %459 = vmatmul.mubr.f32.gmra.mrb[0].mxu0 %v341
    %v460 = vpop.f32.mrb[0].mxu0
    %v461 = vadd.f32 0.0, %v460
    %v462 = vpop.f32.mrb[0].mxu0
    %463 = vmatprep.mubr.f32.mxu0 0.0
    %464 = vmatmul.mubr.f32.gmra.mrb[0].mxu0 %v344
    %v465 = vpop.f32.mrb[0].mxu0
    %v466 = vadd.f32 0.0, %v465
    %v467 = vpop.f32.mrb[0].mxu0
    %468 = vmatprep.mubr.f32.mxu0 0.0
    %469 = vmatmul.mubr.f32.gmra.mrb[0].mxu0 %v347
    %v470 = vpop.f32.mrb[0].mxu0
    %v471 = vadd.f32 0.0, %v470
    %v472 = vpop.f32.mrb[0].mxu0
    %473 = vmatprep.mubr.f32.mxu0 0.0
    %474 = vmatmul.mubr.f32.gmra.mrb[0].mxu0 %v350
    %v475 = vpop.f32.mrb[0].mxu0
    %v476 = vadd.f32 0.0, %v475
    %v477 = vpop.f32.mrb[0].mxu0
    %478 = vmatprep.mubr.f32.mxu0 0.0
    %479 = vmatmul.mubr.f32.gmra.mrb[0].mxu0 %v353
    %v480 = vpop.f32.mrb[0].mxu0
    %v481 = vadd.f32 0.0, %v480
    %v482 = vpop.f32.mrb[0].mxu0
    %483 = vmatprep.mubr.f32.mxu0 0.0
    %484 = vmatmul.mubr.f32.gmra.mrb[0].mxu0 %v356
    %v485 = vpop.f32.mrb[0].mxu0
    %v486 = vadd.f32 0.0, %v485
    %v487 = vpop.f32.mrb[0].mxu0
    %488 = vmatprep.mubr.f32.mxu0 0.0
    %489 = vmatmul.mubr.f32.gmra.mrb[0].mxu0 %v359
    %v490 = vpop.f32.mrb[0].mxu0
    %v491 = vadd.f32 0.0, %v490
    %v492 = vpop.f32.mrb[0].mxu0
    %493 = vmatprep.mubr.f32.mxu0 0.0
    %494 = vmatmul.mubr.f32.gmra.mrb[0].mxu0 %v362
    %v495 = vpop.f32.mrb[0].mxu0
    %v496 = vadd.f32 0.0, %v495
    %v497 = vpop.f32.mrb[0].mxu0
    %498 = vmatprep.mubr.f32.mxu0 0.0
    %499 = vmatmul.mubr.f32.gmra.mrb[0].mxu0 %v365
    %v500 = vpop.f32.mrb[0].mxu0
    %v501 = vadd.f32 0.0, %v500
    %v502 = vpop.f32.mrb[0].mxu0
    %503 = vmatprep.mubr.f32.mxu0 0.0
    %504 = vmatmul.mubr.f32.gmra.mrb[0].mxu0 %v368
    %v505 = vpop.f32.mrb[0].mxu0
    %v506 = vadd.f32 0.0, %v505
    %v507 = vpop.f32.mrb[0].mxu0
    %508 = vmatprep.mubr.f32.mxu0 0.0
    %509 = vmatmul.mubr.f32.gmra.mrb[0].mxu0 %v371
    %v510 = vpop.f32.mrb[0].mxu0
    %v511 = vadd.f32 0.0, %v510
    %v512 = vpop.f32.mrb[0].mxu0
    %513 = vmatprep.mubr.f32.mxu0 0.0
    %514 = vmatmul.mubr.f32.gmra.mrb[0].mxu0 %v374
    %v515 = vpop.f32.mrb[0].mxu0
    %v516 = vadd.f32 0.0, %v515
    %v517 = vpop.f32.mrb[0].mxu0
    %518 = vmatprep.mubr.f32.mxu0 0.0
    %519 = vmatmul.mubr.f32.gmra.mrb[0].mxu0 %v377
    %v520 = vpop.f32.mrb[0].mxu0
    %v521 = vadd.f32 0.0, %v520
    %v522 = vpop.f32.mrb[0].mxu0
    %523 = vdwg.mxu0
    %524 = vxpose.xlu0.b32.start [1/16] %v446, 128
    %525 = vxpose.xlu0.b32.cont [2/16] %v451, 128
    %526 = vxpose.xlu0.b32.cont [3/16] 0.0, 128
    %527 = vxpose.xlu0.b32.cont [4/16] 0.0, 128
    %528 = vxpose.xlu0.b32.cont [5/16] 0.0, 128
    %529 = vxpose.xlu0.b32.cont [6/16] 0.0, 128
    %530 = vxpose.xlu0.b32.cont [7/16] 0.0, 128
    %531 = vxpose.xlu0.b32.cont [8/16] 0.0, 128
    %532 = vxpose.xlu0.b32.cont [9/16] 0.0, 128
    %533 = vxpose.xlu0.b32.cont [10/16] 0.0, 128
    %534 = vxpose.xlu0.b32.cont [11/16] 0.0, 128
    %535 = vxpose.xlu0.b32.cont [12/16] 0.0, 128
    %536 = vxpose.xlu0.b32.cont [13/16] 0.0, 128
    %537 = vxpose.xlu0.b32.cont [14/16] 0.0, 128
    %538 = vxpose.xlu0.b32.cont [15/16] 0.0, 128
    %539 = vxpose.xlu0.b32.end [16/16] 0.0, 128
    %v540 = vpop.trf.xlu0
    %v541 = vpop.trf.xlu0
    %v542 = vpop.trf.xlu0
    %v543 = vpop.trf.xlu0
    %v544 = vpop.trf.xlu0
    %v545 = vpop.trf.xlu0
    %v546 = vpop.trf.xlu0
    %v547 = vpop.trf.xlu0
    %v548 = vpop.trf.xlu0
    %v549 = vpop.trf.xlu0
    %v550 = vpop.trf.xlu0
    %v551 = vpop.trf.xlu0
    %v552 = vpop.trf.xlu0
    %v553 = vpop.trf.xlu0
    %v554 = vpop.trf.xlu0
    %v555 = vpop.trf.xlu0
    %556 = vxpose.xlu0.b32.start [1/16] %v456, 128
    %557 = vxpose.xlu0.b32.cont [2/16] %v461, 128
    %558 = vxpose.xlu0.b32.cont [3/16] 0.0, 128
    %559 = vxpose.xlu0.b32.cont [4/16] 0.0, 128
    %560 = vxpose.xlu0.b32.cont [5/16] 0.0, 128
    %561 = vxpose.xlu0.b32.cont [6/16] 0.0, 128
    %562 = vxpose.xlu0.b32.cont [7/16] 0.0, 128
    %563 = vxpose.xlu0.b32.cont [8/16] 0.0, 128
    %564 = vxpose.xlu0.b32.cont [9/16] 0.0, 128
    %565 = vxpose.xlu0.b32.cont [10/16] 0.0, 128
    %566 = vxpose.xlu0.b32.cont [11/16] 0.0, 128
    %567 = vxpose.xlu0.b32.cont [12/16] 0.0, 128
    %568 = vxpose.xlu0.b32.cont [13/16] 0.0, 128
    %569 = vxpose.xlu0.b32.cont [14/16] 0.0, 128
    %570 = vxpose.xlu0.b32.cont [15/16] 0.0, 128
    %571 = vxpose.xlu0.b32.end [16/16] 0.0, 128
    %v572 = vpop.trf.xlu0
    %v573 = vpop.trf.xlu0
    %v574 = vpop.trf.xlu0
    %v575 = vpop.trf.xlu0
    %v576 = vpop.trf.xlu0
    %v577 = vpop.trf.xlu0
    %v578 = vpop.trf.xlu0
    %v579 = vpop.trf.xlu0
    %v580 = vpop.trf.xlu0
    %v581 = vpop.trf.xlu0
    %v582 = vpop.trf.xlu0
    %v583 = vpop.trf.xlu0
    %v584 = vpop.trf.xlu0
    %v585 = vpop.trf.xlu0
    %v586 = vpop.trf.xlu0
    %v587 = vpop.trf.xlu0
    %588 = vxpose.xlu0.b32.start [1/16] %v466, 128
    %589 = vxpose.xlu0.b32.cont [2/16] %v471, 128
    %590 = vxpose.xlu0.b32.cont [3/16] 0.0, 128
    %591 = vxpose.xlu0.b32.cont [4/16] 0.0, 128
    %592 = vxpose.xlu0.b32.cont [5/16] 0.0, 128
    %593 = vxpose.xlu0.b32.cont [6/16] 0.0, 128
    %594 = vxpose.xlu0.b32.cont [7/16] 0.0, 128
    %595 = vxpose.xlu0.b32.cont [8/16] 0.0, 128
    %596 = vxpose.xlu0.b32.cont [9/16] 0.0, 128
    %597 = vxpose.xlu0.b32.cont [10/16] 0.0, 128
    %598 = vxpose.xlu0.b32.cont [11/16] 0.0, 128
    %599 = vxpose.xlu0.b32.cont [12/16] 0.0, 128
    %600 = vxpose.xlu0.b32.cont [13/16] 0.0, 128
    %601 = vxpose.xlu0.b32.cont [14/16] 0.0, 128
    %602 = vxpose.xlu0.b32.cont [15/16] 0.0, 128
    %603 = vxpose.xlu0.b32.end [16/16] 0.0, 128
    %v604 = vpop.trf.xlu0
    %v605 = vpop.trf.xlu0
    %v606 = vpop.trf.xlu0
    %v607 = vpop.trf.xlu0
    %v608 = vpop.trf.xlu0
    %v609 = vpop.trf.xlu0
    %v610 = vpop.trf.xlu0
    %v611 = vpop.trf.xlu0
    %v612 = vpop.trf.xlu0
    %v613 = vpop.trf.xlu0
    %v614 = vpop.trf.xlu0
    %v615 = vpop.trf.xlu0
    %v616 = vpop.trf.xlu0
    %v617 = vpop.trf.xlu0
    %v618 = vpop.trf.xlu0
    %v619 = vpop.trf.xlu0
    %620 = vxpose.xlu0.b32.start [1/16] %v476, 128
    %621 = vxpose.xlu0.b32.cont [2/16] %v481, 128
    %622 = vxpose.xlu0.b32.cont [3/16] 0.0, 128
    %623 = vxpose.xlu0.b32.cont [4/16] 0.0, 128
    %624 = vxpose.xlu0.b32.cont [5/16] 0.0, 128
    %625 = vxpose.xlu0.b32.cont [6/16] 0.0, 128
    %626 = vxpose.xlu0.b32.cont [7/16] 0.0, 128
    %627 = vxpose.xlu0.b32.cont [8/16] 0.0, 128
    %628 = vxpose.xlu0.b32.cont [9/16] 0.0, 128
    %629 = vxpose.xlu0.b32.cont [10/16] 0.0, 128
    %630 = vxpose.xlu0.b32.cont [11/16] 0.0, 128
    %631 = vxpose.xlu0.b32.cont [12/16] 0.0, 128
    %632 = vxpose.xlu0.b32.cont [13/16] 0.0, 128
    %633 = vxpose.xlu0.b32.cont [14/16] 0.0, 128
    %634 = vxpose.xlu0.b32.cont [15/16] 0.0, 128
    %635 = vxpose.xlu0.b32.end [16/16] 0.0, 128
    %v636 = vpop.trf.xlu0
    %v637 = vpop.trf.xlu0
    %v638 = vpop.trf.xlu0
    %v639 = vpop.trf.xlu0
    %v640 = vpop.trf.xlu0
    %v641 = vpop.trf.xlu0
    %v642 = vpop.trf.xlu0
    %v643 = vpop.trf.xlu0
    %v644 = vpop.trf.xlu0
    %v645 = vpop.trf.xlu0
    %v646 = vpop.trf.xlu0
    %v647 = vpop.trf.xlu0
    %v648 = vpop.trf.xlu0
    %v649 = vpop.trf.xlu0
    %v650 = vpop.trf.xlu0
    %v651 = vpop.trf.xlu0
    %652 = vxpose.xlu0.b32.start [1/16] %v486, 128
    %653 = vxpose.xlu0.b32.cont [2/16] %v491, 128
    %654 = vxpose.xlu0.b32.cont [3/16] 0.0, 128
    %655 = vxpose.xlu0.b32.cont [4/16] 0.0, 128
    %656 = vxpose.xlu0.b32.cont [5/16] 0.0, 128
    %657 = vxpose.xlu0.b32.cont [6/16] 0.0, 128
    %658 = vxpose.xlu0.b32.cont [7/16] 0.0, 128
    %659 = vxpose.xlu0.b32.cont [8/16] 0.0, 128
    %660 = vxpose.xlu0.b32.cont [9/16] 0.0, 128
    %661 = vxpose.xlu0.b32.cont [10/16] 0.0, 128
    %662 = vxpose.xlu0.b32.cont [11/16] 0.0, 128
    %663 = vxpose.xlu0.b32.cont [12/16] 0.0, 128
    %664 = vxpose.xlu0.b32.cont [13/16] 0.0, 128
    %665 = vxpose.xlu0.b32.cont [14/16] 0.0, 128
    %666 = vxpose.xlu0.b32.cont [15/16] 0.0, 128
    %667 = vxpose.xlu0.b32.end [16/16] 0.0, 128
    %v668 = vpop.trf.xlu0
    %v669 = vpop.trf.xlu0
    %v670 = vpop.trf.xlu0
    %v671 = vpop.trf.xlu0
    %v672 = vpop.trf.xlu0
    %v673 = vpop.trf.xlu0
    %v674 = vpop.trf.xlu0
    %v675 = vpop.trf.xlu0
    %v676 = vpop.trf.xlu0
    %v677 = vpop.trf.xlu0
    %v678 = vpop.trf.xlu0
    %v679 = vpop.trf.xlu0
    %v680 = vpop.trf.xlu0
    %v681 = vpop.trf.xlu0
    %v682 = vpop.trf.xlu0
    %v683 = vpop.trf.xlu0
    %684 = vxpose.xlu0.b32.start [1/16] %v496, 128
    %685 = vxpose.xlu0.b32.cont [2/16] %v501, 128
    %686 = vxpose.xlu0.b32.cont [3/16] 0.0, 128
    %687 = vxpose.xlu0.b32.cont [4/16] 0.0, 128
    %688 = vxpose.xlu0.b32.cont [5/16] 0.0, 128
    %689 = vxpose.xlu0.b32.cont [6/16] 0.0, 128
    %690 = vxpose.xlu0.b32.cont [7/16] 0.0, 128
    %691 = vxpose.xlu0.b32.cont [8/16] 0.0, 128
    %692 = vxpose.xlu0.b32.cont [9/16] 0.0, 128
    %693 = vxpose.xlu0.b32.cont [10/16] 0.0, 128
    %694 = vxpose.xlu0.b32.cont [11/16] 0.0, 128
    %695 = vxpose.xlu0.b32.cont [12/16] 0.0, 128
    %696 = vxpose.xlu0.b32.cont [13/16] 0.0, 128
    %697 = vxpose.xlu0.b32.cont [14/16] 0.0, 128
    %698 = vxpose.xlu0.b32.cont [15/16] 0.0, 128
    %699 = vxpose.xlu0.b32.end [16/16] 0.0, 128
    %v700 = vpop.trf.xlu0
    %v701 = vpop.trf.xlu0
    %v702 = vpop.trf.xlu0
    %v703 = vpop.trf.xlu0
    %v704 = vpop.trf.xlu0
    %v705 = vpop.trf.xlu0
    %v706 = vpop.trf.xlu0
    %v707 = vpop.trf.xlu0
    %v708 = vpop.trf.xlu0
    %v709 = vpop.trf.xlu0
    %v710 = vpop.trf.xlu0
    %v711 = vpop.trf.xlu0
    %v712 = vpop.trf.xlu0
    %v713 = vpop.trf.xlu0
    %v714 = vpop.trf.xlu0
    %v715 = vpop.trf.xlu0
    %716 = vxpose.xlu0.b32.start [1/16] %v506, 128
    %717 = vxpose.xlu0.b32.cont [2/16] %v511, 128
    %718 = vxpose.xlu0.b32.cont [3/16] 0.0, 128
    %719 = vxpose.xlu0.b32.cont [4/16] 0.0, 128
    %720 = vxpose.xlu0.b32.cont [5/16] 0.0, 128
    %721 = vxpose.xlu0.b32.cont [6/16] 0.0, 128
    %722 = vxpose.xlu0.b32.cont [7/16] 0.0, 128
    %723 = vxpose.xlu0.b32.cont [8/16] 0.0, 128
    %724 = vxpose.xlu0.b32.cont [9/16] 0.0, 128
    %725 = vxpose.xlu0.b32.cont [10/16] 0.0, 128
    %726 = vxpose.xlu0.b32.cont [11/16] 0.0, 128
    %727 = vxpose.xlu0.b32.cont [12/16] 0.0, 128
    %728 = vxpose.xlu0.b32.cont [13/16] 0.0, 128
    %729 = vxpose.xlu0.b32.cont [14/16] 0.0, 128
    %730 = vxpose.xlu0.b32.cont [15/16] 0.0, 128
    %731 = vxpose.xlu0.b32.end [16/16] 0.0, 128
    %v732 = vpop.trf.xlu0
    %v733 = vpop.trf.xlu0
    %v734 = vpop.trf.xlu0
    %v735 = vpop.trf.xlu0
    %v736 = vpop.trf.xlu0
    %v737 = vpop.trf.xlu0
    %v738 = vpop.trf.xlu0
    %v739 = vpop.trf.xlu0
    %v740 = vpop.trf.xlu0
    %v741 = vpop.trf.xlu0
    %v742 = vpop.trf.xlu0
    %v743 = vpop.trf.xlu0
    %v744 = vpop.trf.xlu0
    %v745 = vpop.trf.xlu0
    %v746 = vpop.trf.xlu0
    %v747 = vpop.trf.xlu0
    %748 = vxpose.xlu0.b32.start [1/16] %v516, 128
    %749 = vxpose.xlu0.b32.cont [2/16] %v521, 128
    %750 = vxpose.xlu0.b32.cont [3/16] 0.0, 128
    %751 = vxpose.xlu0.b32.cont [4/16] 0.0, 128
    %752 = vxpose.xlu0.b32.cont [5/16] 0.0, 128
    %753 = vxpose.xlu0.b32.cont [6/16] 0.0, 128
    %754 = vxpose.xlu0.b32.cont [7/16] 0.0, 128
    %755 = vxpose.xlu0.b32.cont [8/16] 0.0, 128
    %756 = vxpose.xlu0.b32.cont [9/16] 0.0, 128
    %757 = vxpose.xlu0.b32.cont [10/16] 0.0, 128
    %758 = vxpose.xlu0.b32.cont [11/16] 0.0, 128
    %759 = vxpose.xlu0.b32.cont [12/16] 0.0, 128
    %760 = vxpose.xlu0.b32.cont [13/16] 0.0, 128
    %761 = vxpose.xlu0.b32.cont [14/16] 0.0, 128
    %762 = vxpose.xlu0.b32.cont [15/16] 0.0, 128
    %763 = vxpose.xlu0.b32.end [16/16] 0.0, 128
    %v764 = vpop.trf.xlu0
    %v765 = vpop.trf.xlu0
    %v766 = vpop.trf.xlu0
    %v767 = vpop.trf.xlu0
    %v768 = vpop.trf.xlu0
    %v769 = vpop.trf.xlu0
    %v770 = vpop.trf.xlu0
    %v771 = vpop.trf.xlu0
    %v772 = vpop.trf.xlu0
    %v773 = vpop.trf.xlu0
    %v774 = vpop.trf.xlu0
    %v775 = vpop.trf.xlu0
    %v776 = vpop.trf.xlu0
    %v777 = vpop.trf.xlu0
    %v778 = vpop.trf.xlu0
    %v779 = vpop.trf.xlu0
    %v780 = vld [vmem:[#allocation7] sm:$0xff]
    %v781 = vld [vmem:[#allocation7 + $0x8] sm:$0xff]
    %v783 = vsel %vm330, %v540, 0
    %v786 = vsel %vm330, %v541, 0
    %v789 = vsel %vm330, %v542, 0
    %v792 = vsel %vm330, %v543, 0
    %v795 = vsel %vm330, %v572, 0
    %v798 = vsel %vm330, %v573, 0
    %v801 = vsel %vm330, %v574, 0
    %v804 = vsel %vm330, %v575, 0
    %v807 = vsel %vm330, %v604, 0
    %v810 = vsel %vm330, %v605, 0
    %v813 = vsel %vm330, %v606, 0
    %v816 = vsel %vm330, %v607, 0
    %v819 = vsel %vm330, %v636, 0
    %v822 = vsel %vm330, %v637, 0
    %v825 = vsel %vm330, %v638, 0
    %v828 = vsel %vm330, %v639, 0
    %v831 = vsel %vm330, %v668, 0
    %v834 = vsel %vm330, %v669, 0
    %v837 = vsel %vm330, %v670, 0
    %v840 = vsel %vm330, %v671, 0
    %v843 = vsel %vm330, %v700, 0
    %v846 = vsel %vm330, %v701, 0
    %v849 = vsel %vm330, %v702, 0
    %v852 = vsel %vm330, %v703, 0
    %v855 = vsel %vm330, %v732, 0
    %v858 = vsel %vm330, %v733, 0
    %v861 = vsel %vm330, %v734, 0
    %v864 = vsel %vm330, %v735, 0
    %v867 = vsel %vm330, %v764, 0
    %v870 = vsel %vm330, %v765, 0
    %v873 = vsel %vm330, %v766, 0
    %v876 = vsel %vm330, %v767, 0
    %878 = vmatprep.subr.mxu0 0.0
    %879 = vmatpush1.msra.mxu0 %v780
    %880 = vmatprep.subr.mxu0 0.0
    %881 = vmatpush1.msra.mxu0 %v781
    %882 = vmatprep.subr.mxu0 0.0
    %883 = vmatpush1.msra.mxu0 0.0
    %884 = vmatprep.subr.mxu0 0.0
    %885 = vmatpush1.msra.mxu0 0.0
    %886 = vmatprep.subr.mxu0 0.0
    %887 = vmatpush1.msra.mxu0 0.0
    %888 = vmatprep.subr.mxu0 0.0
    %889 = vmatpush1.msra.mxu0 0.0
    %890 = vmatprep.subr.mxu0 0.0
    %891 = vmatpush1.msra.mxu0 0.0
    %892 = vmatprep.subr.mxu0 0.0
    %893 = vmatpush1.msra.mxu0 0.0
    %894 = vmatprep.subr.mxu0 0.0
    %895 = vmatpush1.msra.mxu0 0.0
    %896 = vmatprep.subr.mxu0 0.0
    %897 = vmatpush1.msra.mxu0 0.0
    %898 = vmatprep.subr.mxu0 0.0
    %899 = vmatpush1.msra.mxu0 0.0
    %900 = vmatprep.subr.mxu0 0.0
    %901 = vmatpush1.msra.mxu0 0.0
    %902 = vmatprep.subr.mxu0 0.0
    %903 = vmatpush1.msra.mxu0 0.0
    %904 = vmatprep.subr.mxu0 0.0
    %905 = vmatpush1.msra.mxu0 0.0
    %906 = vmatprep.subr.mxu0 0.0
    %907 = vmatpush1.msra.mxu0 0.0
    %908 = vmatprep.subr.mxu0 0.0
    %909 = vmatpush1.msra.mxu0 0.0
    %910 = vmatprep.subr.mxu0 0.0
    %911 = vmatpush1.msra.mxu0 0.0
    %912 = vmatprep.subr.mxu0 0.0
    %913 = vmatpush1.msra.mxu0 0.0
    %914 = vmatprep.subr.mxu0 0.0
    %915 = vmatpush1.msra.mxu0 0.0
    %916 = vmatprep.subr.mxu0 0.0
    %917 = vmatpush1.msra.mxu0 0.0
    %918 = vmatprep.subr.mxu0 0.0
    %919 = vmatpush1.msra.mxu0 0.0
    %920 = vmatprep.subr.mxu0 0.0
    %921 = vmatpush1.msra.mxu0 0.0
    %922 = vmatprep.subr.mxu0 0.0
    %923 = vmatpush1.msra.mxu0 0.0
    %924 = vmatprep.subr.mxu0 0.0
    %925 = vmatpush1.msra.mxu0 0.0
    %926 = vmatprep.subr.mxu0 0.0
    %927 = vmatpush1.msra.mxu0 0.0
    %928 = vmatprep.subr.mxu0 0.0
    %929 = vmatpush1.msra.mxu0 0.0
    %930 = vmatprep.subr.mxu0 0.0
    %931 = vmatpush1.msra.mxu0 0.0
    %932 = vmatprep.subr.mxu0 0.0
    %933 = vmatpush1.msra.mxu0 0.0
    %934 = vmatprep.subr.mxu0 0.0
    %935 = vmatpush1.msra.mxu0 0.0
    %936 = vmatprep.subr.mxu0 0.0
    %937 = vmatpush1.msra.mxu0 0.0
    %938 = vmatprep.subr.mxu0 0.0
    %939 = vmatpush1.msra.mxu0 0.0
    %940 = vmatprep.subr.mxu0 0.0
    %941 = vmatpush1.msra.mxu0 0.0
    %942 = vmatprep.mubr.f32.mxu0 0.0
    %943 = vmatmul.mubr.f32.gmra.mrb[0].mxu0 %v783
    %v944 = vpop.f32.mrb[0].mxu0
    %v945 = vadd.f32 0.0, %v944
    %v946 = vpop.f32.mrb[0].mxu0
    %947 = vmatprep.mubr.f32.mxu0 0.0
    %948 = vmatmul.mubr.f32.gmra.mrb[0].mxu0 %v786
    %v949 = vpop.f32.mrb[0].mxu0
    %v950 = vadd.f32 0.0, %v949
    %v951 = vpop.f32.mrb[0].mxu0
    %952 = vmatprep.mubr.f32.mxu0 0.0
    %953 = vmatmul.mubr.f32.gmra.mrb[0].mxu0 %v789
    %v954 = vpop.f32.mrb[0].mxu0
    %v955 = vadd.f32 0.0, %v954
    %v956 = vpop.f32.mrb[0].mxu0
    %957 = vmatprep.mubr.f32.mxu0 0.0
    %958 = vmatmul.mubr.f32.gmra.mrb[0].mxu0 %v792
    %v959 = vpop.f32.mrb[0].mxu0
    %v960 = vadd.f32 0.0, %v959
    %v961 = vpop.f32.mrb[0].mxu0
    %962 = vmatprep.mubr.f32.mxu0 0.0
    %963 = vmatmul.mubr.f32.gmra.mrb[0].mxu0 %v795
    %v964 = vpop.f32.mrb[0].mxu0
    %v965 = vadd.f32 0.0, %v964
    %v966 = vpop.f32.mrb[0].mxu0
    %967 = vmatprep.mubr.f32.mxu0 0.0
    %968 = vmatmul.mubr.f32.gmra.mrb[0].mxu0 %v798
    %v969 = vpop.f32.mrb[0].mxu0
    %v970 = vadd.f32 0.0, %v969
    %v971 = vpop.f32.mrb[0].mxu0
    %972 = vmatprep.mubr.f32.mxu0 0.0
    %973 = vmatmul.mubr.f32.gmra.mrb[0].mxu0 %v801
    %v974 = vpop.f32.mrb[0].mxu0
    %v975 = vadd.f32 0.0, %v974
    %v976 = vpop.f32.mrb[0].mxu0
    %977 = vmatprep.mubr.f32.mxu0 0.0
    %978 = vmatmul.mubr.f32.gmra.mrb[0].mxu0 %v804
    %v979 = vpop.f32.mrb[0].mxu0
    %v980 = vadd.f32 0.0, %v979
    %v981 = vpop.f32.mrb[0].mxu0
    %982 = vmatprep.mubr.f32.mxu0 0.0
    %983 = vmatmul.mubr.f32.gmra.mrb[0].mxu0 %v807
    %v984 = vpop.f32.mrb[0].mxu0
    %v985 = vadd.f32 0.0, %v984
    %v986 = vpop.f32.mrb[0].mxu0
    %987 = vmatprep.mubr.f32.mxu0 0.0
    %988 = vmatmul.mubr.f32.gmra.mrb[0].mxu0 %v810
    %v989 = vpop.f32.mrb[0].mxu0
    %v990 = vadd.f32 0.0, %v989
    %v991 = vpop.f32.mrb[0].mxu0
    %992 = vmatprep.mubr.f32.mxu0 0.0
    %993 = vmatmul.mubr.f32.gmra.mrb[0].mxu0 %v813
    %v994 = vpop.f32.mrb[0].mxu0
    %v995 = vadd.f32 0.0, %v994
    %v996 = vpop.f32.mrb[0].mxu0
    %997 = vmatprep.mubr.f32.mxu0 0.0
    %998 = vmatmul.mubr.f32.gmra.mrb[0].mxu0 %v816
    %v999 = vpop.f32.mrb[0].mxu0
    %v1000 = vadd.f32 0.0, %v999
    %v1001 = vpop.f32.mrb[0].mxu0
    %1002 = vmatprep.mubr.f32.mxu0 0.0
    %1003 = vmatmul.mubr.f32.gmra.mrb[0].mxu0 %v819
    %v1004 = vpop.f32.mrb[0].mxu0
    %v1005 = vadd.f32 0.0, %v1004
    %v1006 = vpop.f32.mrb[0].mxu0
    %1007 = vmatprep.mubr.f32.mxu0 0.0
    %1008 = vmatmul.mubr.f32.gmra.mrb[0].mxu0 %v822
    %v1009 = vpop.f32.mrb[0].mxu0
    %v1010 = vadd.f32 0.0, %v1009
    %v1011 = vpop.f32.mrb[0].mxu0
    %1012 = vmatprep.mubr.f32.mxu0 0.0
    %1013 = vmatmul.mubr.f32.gmra.mrb[0].mxu0 %v825
    %v1014 = vpop.f32.mrb[0].mxu0
    %v1015 = vadd.f32 0.0, %v1014
    %v1016 = vpop.f32.mrb[0].mxu0
    %1017 = vmatprep.mubr.f32.mxu0 0.0
    %1018 = vmatmul.mubr.f32.gmra.mrb[0].mxu0 %v828
    %v1019 = vpop.f32.mrb[0].mxu0
    %v1020 = vadd.f32 0.0, %v1019
    %v1021 = vpop.f32.mrb[0].mxu0
    %1022 = vmatprep.mubr.f32.mxu0 0.0
    %1023 = vmatmul.mubr.f32.gmra.mrb[0].mxu0 %v831
    %v1024 = vpop.f32.mrb[0].mxu0
    %v1025 = vadd.f32 0.0, %v1024
    %v1026 = vpop.f32.mrb[0].mxu0
    %1027 = vmatprep.mubr.f32.mxu0 0.0
    %1028 = vmatmul.mubr.f32.gmra.mrb[0].mxu0 %v834
    %v1029 = vpop.f32.mrb[0].mxu0
    %v1030 = vadd.f32 0.0, %v1029
    %v1031 = vpop.f32.mrb[0].mxu0
    %1032 = vmatprep.mubr.f32.mxu0 0.0
    %1033 = vmatmul.mubr.f32.gmra.mrb[0].mxu0 %v837
    %v1034 = vpop.f32.mrb[0].mxu0
    %v1035 = vadd.f32 0.0, %v1034
    %v1036 = vpop.f32.mrb[0].mxu0
    %1037 = vmatprep.mubr.f32.mxu0 0.0
    %1038 = vmatmul.mubr.f32.gmra.mrb[0].mxu0 %v840
    %v1039 = vpop.f32.mrb[0].mxu0
    %v1040 = vadd.f32 0.0, %v1039
    %v1041 = vpop.f32.mrb[0].mxu0
    %1042 = vmatprep.mubr.f32.mxu0 0.0
    %1043 = vmatmul.mubr.f32.gmra.mrb[0].mxu0 %v843
    %v1044 = vpop.f32.mrb[0].mxu0
    %v1045 = vadd.f32 0.0, %v1044
    %v1046 = vpop.f32.mrb[0].mxu0
    %1047 = vmatprep.mubr.f32.mxu0 0.0
    %1048 = vmatmul.mubr.f32.gmra.mrb[0].mxu0 %v846
    %v1049 = vpop.f32.mrb[0].mxu0
    %v1050 = vadd.f32 0.0, %v1049
    %v1051 = vpop.f32.mrb[0].mxu0
    %1052 = vmatprep.mubr.f32.mxu0 0.0
    %1053 = vmatmul.mubr.f32.gmra.mrb[0].mxu0 %v849
    %v1054 = vpop.f32.mrb[0].mxu0
    %v1055 = vadd.f32 0.0, %v1054
    %v1056 = vpop.f32.mrb[0].mxu0
    %1057 = vmatprep.mubr.f32.mxu0 0.0
    %1058 = vmatmul.mubr.f32.gmra.mrb[0].mxu0 %v852
    %v1059 = vpop.f32.mrb[0].mxu0
    %v1060 = vadd.f32 0.0, %v1059
    %v1061 = vpop.f32.mrb[0].mxu0
    %1062 = vmatprep.mubr.f32.mxu0 0.0
    %1063 = vmatmul.mubr.f32.gmra.mrb[0].mxu0 %v855
    %v1064 = vpop.f32.mrb[0].mxu0
    %v1065 = vadd.f32 0.0, %v1064
    %v1066 = vpop.f32.mrb[0].mxu0
    %1067 = vmatprep.mubr.f32.mxu0 0.0
    %1068 = vmatmul.mubr.f32.gmra.mrb[0].mxu0 %v858
    %v1069 = vpop.f32.mrb[0].mxu0
    %v1070 = vadd.f32 0.0, %v1069
    %v1071 = vpop.f32.mrb[0].mxu0
    %1072 = vmatprep.mubr.f32.mxu0 0.0
    %1073 = vmatmul.mubr.f32.gmra.mrb[0].mxu0 %v861
    %v1074 = vpop.f32.mrb[0].mxu0
    %v1075 = vadd.f32 0.0, %v1074
    %v1076 = vpop.f32.mrb[0].mxu0
    %1077 = vmatprep.mubr.f32.mxu0 0.0
    %1078 = vmatmul.mubr.f32.gmra.mrb[0].mxu0 %v864
    %v1079 = vpop.f32.mrb[0].mxu0
    %v1080 = vadd.f32 0.0, %v1079
    %v1081 = vpop.f32.mrb[0].mxu0
    %1082 = vmatprep.mubr.f32.mxu0 0.0
    %1083 = vmatmul.mubr.f32.gmra.mrb[0].mxu0 %v867
    %v1084 = vpop.f32.mrb[0].mxu0
    %v1085 = vadd.f32 0.0, %v1084
    %v1086 = vpop.f32.mrb[0].mxu0
    %1087 = vmatprep.mubr.f32.mxu0 0.0
    %1088 = vmatmul.mubr.f32.gmra.mrb[0].mxu0 %v870
    %v1089 = vpop.f32.mrb[0].mxu0
    %v1090 = vadd.f32 0.0, %v1089
    %v1091 = vpop.f32.mrb[0].mxu0
    %1092 = vmatprep.mubr.f32.mxu0 0.0
    %1093 = vmatmul.mubr.f32.gmra.mrb[0].mxu0 %v873
    %v1094 = vpop.f32.mrb[0].mxu0
    %v1095 = vadd.f32 0.0, %v1094
    %v1096 = vpop.f32.mrb[0].mxu0
    %1097 = vmatprep.mubr.f32.mxu0 0.0
    %1098 = vmatmul.mubr.f32.gmra.mrb[0].mxu0 %v876
    %v1099 = vpop.f32.mrb[0].mxu0
    %v1100 = vadd.f32 0.0, %v1099
    %v1101 = vpop.f32.mrb[0].mxu0
    %1102 = vdwg.mxu0
    %v1111 = vrot.slane %v965, 7
    %vm1112 = vcmask 1041409
    %v1113 = vsel %vm1112, %v1111, %v945
    %v1114 = vrot.slane %v985, 6
    %vm1115 = vcmask 1042434
    %v1116 = vsel %vm1115, %v1114, %v1113
    %v1117 = vrot.slane %v1005, 5
    %vm1118 = vcmask 1043459
    %v1119 = vsel %vm1118, %v1117, %v1116
    %v1120 = vrot.slane %v1025, 4
    %vm1121 = vcmask 1044484
    %v1122 = vsel %vm1121, %v1120, %v1119
    %v1123 = vrot.slane %v1045, 3
    %vm1124 = vcmask 1045509
    %v1125 = vsel %vm1124, %v1123, %v1122
    %v1126 = vrot.slane %v1065, 2
    %vm1127 = vcmask 1046534
    %v1128 = vsel %vm1127, %v1126, %v1125
    %v1129 = vrot.slane %v1085, 1
    %vm1130 = vcmask 1047559
    %v1131 = vsel %vm1130, %v1129, %v1128
    %v1133 = vrot.slane %v945, 1
    %v1134 = vsel %vm1112, %v965, %v1133
    %v1135 = vrot.slane %v985, 7
    %v1136 = vsel %vm1115, %v1135, %v1134
    %v1137 = vrot.slane %v1005, 6
    %v1138 = vsel %vm1118, %v1137, %v1136
    %v1139 = vrot.slane %v1025, 5
    %v1140 = vsel %vm1121, %v1139, %v1138
    %v1141 = vrot.slane %v1045, 4
    %v1142 = vsel %vm1124, %v1141, %v1140
    %v1143 = vrot.slane %v1065, 3
    %v1144 = vsel %vm1127, %v1143, %v1142
    %v1145 = vrot.slane %v1085, 2
    %v1146 = vsel %vm1130, %v1145, %v1144
    %1147 = vrot.lane.b32.xlu0 %v1146, 32
    %v1148 = vpop.permute.xlu0 %1147
    %v1150 = vrot.slane %v945, 2
    %v1151 = vrot.slane %v965, 1
    %v1152 = vsel %vm1112, %v1151, %v1150
    %v1153 = vsel %vm1115, %v985, %v1152
    %v1154 = vrot.slane %v1005, 7
    %v1155 = vsel %vm1118, %v1154, %v1153
    %v1156 = vrot.slane %v1025, 6
    %v1157 = vsel %vm1121, %v1156, %v1155
    %v1158 = vrot.slane %v1045, 5
    %v1159 = vsel %vm1124, %v1158, %v1157
    %v1160 = vrot.slane %v1065, 4
    %v1161 = vsel %vm1127, %v1160, %v1159
    %v1162 = vrot.slane %v1085, 3
    %v1163 = vsel %vm1130, %v1162, %v1161
    %1164 = vrot.lane.b32.xlu0 %v1163, 64
    %v1165 = vpop.permute.xlu0 %1164
    %v1167 = vrot.slane %v945, 3
    %v1168 = vrot.slane %v965, 2
    %v1169 = vsel %vm1112, %v1168, %v1167
    %v1170 = vrot.slane %v985, 1
    %v1171 = vsel %vm1115, %v1170, %v1169
    %v1172 = vsel %vm1118, %v1005, %v1171
    %v1173 = vrot.slane %v1025, 7
    %v1174 = vsel %vm1121, %v1173, %v1172
    %v1175 = vrot.slane %v1045, 6
    %v1176 = vsel %vm1124, %v1175, %v1174
    %v1177 = vrot.slane %v1065, 5
    %v1178 = vsel %vm1127, %v1177, %v1176
    %v1179 = vrot.slane %v1085, 4
    %v1180 = vsel %vm1130, %v1179, %v1178
    %1181 = vrot.lane.b32.xlu0 %v1180, 96
    %v1182 = vpop.permute.xlu0 %1181
    %vm1184 = vcmask 261120
    %v1185 = vsel %vm1184, %v1131, %v1148
    %vm1186 = vcmask 523264
    %v1187 = vsel %vm1186, %v1185, %v1165
    %vm1188 = vcmask 785408
    %v1189 = vsel %vm1188, %v1187, %v1182
    %1190 = vst [vmem:[#allocation8] sm:$0xff] %v1189
    %v1191 = vsel %vm1124, %v1111, %v945
    %v1192 = vsel %vm1127, %v1114, %v1191
    %v1193 = vsel %vm1130, %v1117, %v1192
    %v1194 = vsel %vm1112, %v1123, %v1120
    %v1195 = vsel %vm1115, %v1126, %v1194
    %v1196 = vsel %vm1118, %v1129, %v1195
    %v1199 = vsel %vm1124, %v965, %v1133
    %v1200 = vsel %vm1127, %v1135, %v1199
    %v1201 = vsel %vm1130, %v1137, %v1200
    %v1202 = vsel %vm1112, %v1141, %v1139
    %v1203 = vsel %vm1115, %v1143, %v1202
    %v1204 = vsel %vm1118, %v1145, %v1203
    %1205 = vrot.lane.b32.xlu0 %v1201, 32
    %v1206 = vpop.permute.xlu0 %1205
    %1207 = vrot.lane.b32.xlu0 %v1204, 32
    %v1208 = vpop.permute.xlu0 %1207
    %v1211 = vsel %vm1124, %v1151, %v1150
    %v1212 = vsel %vm1127, %v985, %v1211
    %v1213 = vsel %vm1130, %v1154, %v1212
    %v1214 = vsel %vm1112, %v1158, %v1156
    %v1215 = vsel %vm1115, %v1160, %v1214
    %v1216 = vsel %vm1118, %v1162, %v1215
    %1217 = vrot.lane.b32.xlu0 %v1213, 64
    %v1218 = vpop.permute.xlu0 %1217
    %1219 = vrot.lane.b32.xlu0 %v1216, 64
    %v1220 = vpop.permute.xlu0 %1219
    %v1223 = vsel %vm1124, %v1168, %v1167
    %v1224 = vsel %vm1127, %v1170, %v1223
    %v1225 = vsel %vm1130, %v1005, %v1224
    %v1226 = vsel %vm1112, %v1175, %v1173
    %v1227 = vsel %vm1115, %v1177, %v1226
    %v1228 = vsel %vm1118, %v1179, %v1227
    %1229 = vrot.lane.b32.xlu0 %v1225, 96
    %v1230 = vpop.permute.xlu0 %1229
    %1231 = vrot.lane.b32.xlu0 %v1228, 96
    %v1232 = vpop.permute.xlu0 %1231
    %v1235 = vsel %vm1184, %v1193, %v1206
    %v1236 = vsel %vm1184, %v1196, %v1208
    %v1237 = vsel %vm1186, %v1235, %v1218
    %v1238 = vsel %vm1186, %v1236, %v1220
    %v1239 = vsel %vm1188, %v1237, %v1230
    %v1240 = vsel %vm1188, %v1238, %v1232
    %vm1243 = vcmask 1043456
    %v1244 = vrot.slane %v1239, 4
    %v1245 = vrot.slane %v1240, 4
    %v1246 = vsel %vm1243, %v1244, %v1245
    %1248 = vst [vmem:[#allocation8 + $0x8] sm:$0xff] %v1246
    %v1257 = vrot.slane %v970, 7
    %v1258 = vsel %vm1112, %v1257, %v950
    %v1259 = vrot.slane %v990, 6
    %v1260 = vsel %vm1115, %v1259, %v1258
    %v1261 = vrot.slane %v1010, 5
    %v1262 = vsel %vm1118, %v1261, %v1260
    %v1263 = vrot.slane %v1030, 4
    %v1264 = vsel %vm1121, %v1263, %v1262
    %v1265 = vrot.slane %v1050, 3
    %v1266 = vsel %vm1124, %v1265, %v1264
    %v1267 = vrot.slane %v1070, 2
    %v1268 = vsel %vm1127, %v1267, %v1266
    %v1269 = vrot.slane %v1090, 1
    %v1270 = vsel %vm1130, %v1269, %v1268
    %v1272 = vrot.slane %v950, 1
    %v1273 = vsel %vm1112, %v970, %v1272
    %v1274 = vrot.slane %v990, 7
    %v1275 = vsel %vm1115, %v1274, %v1273
    %v1276 = vrot.slane %v1010, 6
    %v1277 = vsel %vm1118, %v1276, %v1275
    %v1278 = vrot.slane %v1030, 5
    %v1279 = vsel %vm1121, %v1278, %v1277
    %v1280 = vrot.slane %v1050, 4
    %v1281 = vsel %vm1124, %v1280, %v1279
    %v1282 = vrot.slane %v1070, 3
    %v1283 = vsel %vm1127, %v1282, %v1281
    %v1284 = vrot.slane %v1090, 2
    %v1285 = vsel %vm1130, %v1284, %v1283
    %1286 = vrot.lane.b32.xlu0 %v1285, 32
    %v1287 = vpop.permute.xlu0 %1286
    %v1289 = vrot.slane %v950, 2
    %v1290 = vrot.slane %v970, 1
    %v1291 = vsel %vm1112, %v1290, %v1289
    %v1292 = vsel %vm1115, %v990, %v1291
    %v1293 = vrot.slane %v1010, 7
    %v1294 = vsel %vm1118, %v1293, %v1292
    %v1295 = vrot.slane %v1030, 6
    %v1296 = vsel %vm1121, %v1295, %v1294
    %v1297 = vrot.slane %v1050, 5
    %v1298 = vsel %vm1124, %v1297, %v1296
    %v1299 = vrot.slane %v1070, 4
    %v1300 = vsel %vm1127, %v1299, %v1298
    %v1301 = vrot.slane %v1090, 3
    %v1302 = vsel %vm1130, %v1301, %v1300
    %1303 = vrot.lane.b32.xlu0 %v1302, 64
    %v1304 = vpop.permute.xlu0 %1303
    %v1306 = vrot.slane %v950, 3
    %v1307 = vrot.slane %v970, 2
    %v1308 = vsel %vm1112, %v1307, %v1306
    %v1309 = vrot.slane %v990, 1
    %v1310 = vsel %vm1115, %v1309, %v1308
    %v1311 = vsel %vm1118, %v1010, %v1310
    %v1312 = vrot.slane %v1030, 7
    %v1313 = vsel %vm1121, %v1312, %v1311
    %v1314 = vrot.slane %v1050, 6
    %v1315 = vsel %vm1124, %v1314, %v1313
    %v1316 = vrot.slane %v1070, 5
    %v1317 = vsel %vm1127, %v1316, %v1315
    %v1318 = vrot.slane %v1090, 4
    %v1319 = vsel %vm1130, %v1318, %v1317
    %1320 = vrot.lane.b32.xlu0 %v1319, 96
    %v1321 = vpop.permute.xlu0 %1320
    %v1323 = vsel %vm1184, %v1270, %v1287
    %v1324 = vsel %vm1186, %v1323, %v1304
    %v1325 = vsel %vm1188, %v1324, %v1321
    %1326 = vst [vmem:[#allocation8 + $0x10] sm:$0xff] %v1325
    %v1327 = vsel %vm1124, %v1257, %v950
    %v1328 = vsel %vm1127, %v1259, %v1327
    %v1329 = vsel %vm1130, %v1261, %v1328
    %v1330 = vsel %vm1112, %v1265, %v1263
    %v1331 = vsel %vm1115, %v1267, %v1330
    %v1332 = vsel %vm1118, %v1269, %v1331
    %v1335 = vsel %vm1124, %v970, %v1272
    %v1336 = vsel %vm1127, %v1274, %v1335
    %v1337 = vsel %vm1130, %v1276, %v1336
    %v1338 = vsel %vm1112, %v1280, %v1278
    %v1339 = vsel %vm1115, %v1282, %v1338
    %v1340 = vsel %vm1118, %v1284, %v1339
    %1341 = vrot.lane.b32.xlu0 %v1337, 32
    %v1342 = vpop.permute.xlu0 %1341
    %1343 = vrot.lane.b32.xlu0 %v1340, 32
    %v1344 = vpop.permute.xlu0 %1343
    %v1347 = vsel %vm1124, %v1290, %v1289
    %v1348 = vsel %vm1127, %v990, %v1347
    %v1349 = vsel %vm1130, %v1293, %v1348
    %v1350 = vsel %vm1112, %v1297, %v1295
    %v1351 = vsel %vm1115, %v1299, %v1350
    %v1352 = vsel %vm1118, %v1301, %v1351
    %1353 = vrot.lane.b32.xlu0 %v1349, 64
    %v1354 = vpop.permute.xlu0 %1353
    %1355 = vrot.lane.b32.xlu0 %v1352, 64
    %v1356 = vpop.permute.xlu0 %1355
    %v1359 = vsel %vm1124, %v1307, %v1306
    %v1360 = vsel %vm1127, %v1309, %v1359
    %v1361 = vsel %vm1130, %v1010, %v1360
    %v1362 = vsel %vm1112, %v1314, %v1312
    %v1363 = vsel %vm1115, %v1316, %v1362
    %v1364 = vsel %vm1118, %v1318, %v1363
    %1365 = vrot.lane.b32.xlu0 %v1361, 96
    %v1366 = vpop.permute.xlu0 %1365
    %1367 = vrot.lane.b32.xlu0 %v1364, 96
    %v1368 = vpop.permute.xlu0 %1367
    %v1371 = vsel %vm1184, %v1329, %v1342
    %v1372 = vsel %vm1184, %v1332, %v1344
    %v1373 = vsel %vm1186, %v1371, %v1354
    %v1374 = vsel %vm1186, %v1372, %v1356
    %v1375 = vsel %vm1188, %v1373, %v1366
    %v1376 = vsel %vm1188, %v1374, %v1368
    %v1379 = vrot.slane %v1375, 4
    %v1380 = vrot.slane %v1376, 4
    %v1381 = vsel %vm1243, %v1379, %v1380
    %1383 = vst [vmem:[#allocation8 + $0x18] sm:$0xff] %v1381
    %v1392 = vrot.slane %v975, 7
    %v1393 = vsel %vm1112, %v1392, %v955
    %v1394 = vrot.slane %v995, 6
    %v1395 = vsel %vm1115, %v1394, %v1393
    %v1396 = vrot.slane %v1015, 5
    %v1397 = vsel %vm1118, %v1396, %v1395
    %v1398 = vrot.slane %v1035, 4
    %v1399 = vsel %vm1121, %v1398, %v1397
    %v1400 = vrot.slane %v1055, 3
    %v1401 = vsel %vm1124, %v1400, %v1399
    %v1402 = vrot.slane %v1075, 2
    %v1403 = vsel %vm1127, %v1402, %v1401
    %v1404 = vrot.slane %v1095, 1
    %v1405 = vsel %vm1130, %v1404, %v1403
    %v1407 = vrot.slane %v955, 1
    %v1408 = vsel %vm1112, %v975, %v1407
    %v1409 = vrot.slane %v995, 7
    %v1410 = vsel %vm1115, %v1409, %v1408
    %v1411 = vrot.slane %v1015, 6
    %v1412 = vsel %vm1118, %v1411, %v1410
    %v1413 = vrot.slane %v1035, 5
    %v1414 = vsel %vm1121, %v1413, %v1412
    %v1415 = vrot.slane %v1055, 4
    %v1416 = vsel %vm1124, %v1415, %v1414
    %v1417 = vrot.slane %v1075, 3
    %v1418 = vsel %vm1127, %v1417, %v1416
    %v1419 = vrot.slane %v1095, 2
    %v1420 = vsel %vm1130, %v1419, %v1418
    %1421 = vrot.lane.b32.xlu0 %v1420, 32
    %v1422 = vpop.permute.xlu0 %1421
    %v1424 = vrot.slane %v955, 2
    %v1425 = vrot.slane %v975, 1
    %v1426 = vsel %vm1112, %v1425, %v1424
    %v1427 = vsel %vm1115, %v995, %v1426
    %v1428 = vrot.slane %v1015, 7
    %v1429 = vsel %vm1118, %v1428, %v1427
    %v1430 = vrot.slane %v1035, 6
    %v1431 = vsel %vm1121, %v1430, %v1429
    %v1432 = vrot.slane %v1055, 5
    %v1433 = vsel %vm1124, %v1432, %v1431
    %v1434 = vrot.slane %v1075, 4
    %v1435 = vsel %vm1127, %v1434, %v1433
    %v1436 = vrot.slane %v1095, 3
    %v1437 = vsel %vm1130, %v1436, %v1435
    %1438 = vrot.lane.b32.xlu0 %v1437, 64
    %v1439 = vpop.permute.xlu0 %1438
    %v1441 = vrot.slane %v955, 3
    %v1442 = vrot.slane %v975, 2
    %v1443 = vsel %vm1112, %v1442, %v1441
    %v1444 = vrot.slane %v995, 1
    %v1445 = vsel %vm1115, %v1444, %v1443
    %v1446 = vsel %vm1118, %v1015, %v1445
    %v1447 = vrot.slane %v1035, 7
    %v1448 = vsel %vm1121, %v1447, %v1446
    %v1449 = vrot.slane %v1055, 6
    %v1450 = vsel %vm1124, %v1449, %v1448
    %v1451 = vrot.slane %v1075, 5
    %v1452 = vsel %vm1127, %v1451, %v1450
    %v1453 = vrot.slane %v1095, 4
    %v1454 = vsel %vm1130, %v1453, %v1452
    %1455 = vrot.lane.b32.xlu0 %v1454, 96
    %v1456 = vpop.permute.xlu0 %1455
    %v1458 = vsel %vm1184, %v1405, %v1422
    %v1459 = vsel %vm1186, %v1458, %v1439
    %v1460 = vsel %vm1188, %v1459, %v1456
    %1461 = vst [vmem:[#allocation8 + $0x20] sm:$0xff] %v1460
    %v1462 = vsel %vm1124, %v1392, %v955
    %v1463 = vsel %vm1127, %v1394, %v1462
    %v1464 = vsel %vm1130, %v1396, %v1463
    %v1465 = vsel %vm1112, %v1400, %v1398
    %v1466 = vsel %vm1115, %v1402, %v1465
    %v1467 = vsel %vm1118, %v1404, %v1466
    %v1470 = vsel %vm1124, %v975, %v1407
    %v1471 = vsel %vm1127, %v1409, %v1470
    %v1472 = vsel %vm1130, %v1411, %v1471
    %v1473 = vsel %vm1112, %v1415, %v1413
    %v1474 = vsel %vm1115, %v1417, %v1473
    %v1475 = vsel %vm1118, %v1419, %v1474
    %1476 = vrot.lane.b32.xlu0 %v1472, 32
    %v1477 = vpop.permute.xlu0 %1476
    %1478 = vrot.lane.b32.xlu0 %v1475, 32
    %v1479 = vpop.permute.xlu0 %1478
    %v1482 = vsel %vm1124, %v1425, %v1424
    %v1483 = vsel %vm1127, %v995, %v1482
    %v1484 = vsel %vm1130, %v1428, %v1483
    %v1485 = vsel %vm1112, %v1432, %v1430
    %v1486 = vsel %vm1115, %v1434, %v1485
    %v1487 = vsel %vm1118, %v1436, %v1486
    %1488 = vrot.lane.b32.xlu0 %v1484, 64
    %v1489 = vpop.permute.xlu0 %1488
    %1490 = vrot.lane.b32.xlu0 %v1487, 64
    %v1491 = vpop.permute.xlu0 %1490
    %v1494 = vsel %vm1124, %v1442, %v1441
    %v1495 = vsel %vm1127, %v1444, %v1494
    %v1496 = vsel %vm1130, %v1015, %v1495
    %v1497 = vsel %vm1112, %v1449, %v1447
    %v1498 = vsel %vm1115, %v1451, %v1497
    %v1499 = vsel %vm1118, %v1453, %v1498
    %1500 = vrot.lane.b32.xlu0 %v1496, 96
    %v1501 = vpop.permute.xlu0 %1500
    %1502 = vrot.lane.b32.xlu0 %v1499, 96
    %v1503 = vpop.permute.xlu0 %1502
    %v1506 = vsel %vm1184, %v1464, %v1477
    %v1507 = vsel %vm1184, %v1467, %v1479
    %v1508 = vsel %vm1186, %v1506, %v1489
    %v1509 = vsel %vm1186, %v1507, %v1491
    %v1510 = vsel %vm1188, %v1508, %v1501
    %v1511 = vsel %vm1188, %v1509, %v1503
    %v1514 = vrot.slane %v1510, 4
    %v1515 = vrot.slane %v1511, 4
    %v1516 = vsel %vm1243, %v1514, %v1515
    %1518 = vst [vmem:[#allocation8 + $0x28] sm:$0xff] %v1516
    %v1527 = vrot.slane %v980, 7
    %v1528 = vsel %vm1112, %v1527, %v960
    %v1529 = vrot.slane %v1000, 6
    %v1530 = vsel %vm1115, %v1529, %v1528
    %v1531 = vrot.slane %v1020, 5
    %v1532 = vsel %vm1118, %v1531, %v1530
    %v1533 = vrot.slane %v1040, 4
    %v1534 = vsel %vm1121, %v1533, %v1532
    %v1535 = vrot.slane %v1060, 3
    %v1536 = vsel %vm1124, %v1535, %v1534
    %v1537 = vrot.slane %v1080, 2
    %v1538 = vsel %vm1127, %v1537, %v1536
    %v1539 = vrot.slane %v1100, 1
    %v1540 = vsel %vm1130, %v1539, %v1538
    %v1542 = vrot.slane %v960, 1
    %v1543 = vsel %vm1112, %v980, %v1542
    %v1544 = vrot.slane %v1000, 7
    %v1545 = vsel %vm1115, %v1544, %v1543
    %v1546 = vrot.slane %v1020, 6
    %v1547 = vsel %vm1118, %v1546, %v1545
    %v1548 = vrot.slane %v1040, 5
    %v1549 = vsel %vm1121, %v1548, %v1547
    %v1550 = vrot.slane %v1060, 4
    %v1551 = vsel %vm1124, %v1550, %v1549
    %v1552 = vrot.slane %v1080, 3
    %v1553 = vsel %vm1127, %v1552, %v1551
    %v1554 = vrot.slane %v1100, 2
    %v1555 = vsel %vm1130, %v1554, %v1553
    %1556 = vrot.lane.b32.xlu0 %v1555, 32
    %v1557 = vpop.permute.xlu0 %1556
    %v1559 = vrot.slane %v960, 2
    %v1560 = vrot.slane %v980, 1
    %v1561 = vsel %vm1112, %v1560, %v1559
    %v1562 = vsel %vm1115, %v1000, %v1561
    %v1563 = vrot.slane %v1020, 7
    %v1564 = vsel %vm1118, %v1563, %v1562
    %v1565 = vrot.slane %v1040, 6
    %v1566 = vsel %vm1121, %v1565, %v1564
    %v1567 = vrot.slane %v1060, 5
    %v1568 = vsel %vm1124, %v1567, %v1566
    %v1569 = vrot.slane %v1080, 4
    %v1570 = vsel %vm1127, %v1569, %v1568
    %v1571 = vrot.slane %v1100, 3
    %v1572 = vsel %vm1130, %v1571, %v1570
    %1573 = vrot.lane.b32.xlu0 %v1572, 64
    %v1574 = vpop.permute.xlu0 %1573
    %v1576 = vrot.slane %v960, 3
    %v1577 = vrot.slane %v980, 2
    %v1578 = vsel %vm1112, %v1577, %v1576
    %v1579 = vrot.slane %v1000, 1
    %v1580 = vsel %vm1115, %v1579, %v1578
    %v1581 = vsel %vm1118, %v1020, %v1580
    %v1582 = vrot.slane %v1040, 7
    %v1583 = vsel %vm1121, %v1582, %v1581
    %v1584 = vrot.slane %v1060, 6
    %v1585 = vsel %vm1124, %v1584, %v1583
    %v1586 = vrot.slane %v1080, 5
    %v1587 = vsel %vm1127, %v1586, %v1585
    %v1588 = vrot.slane %v1100, 4
    %v1589 = vsel %vm1130, %v1588, %v1587
    %1590 = vrot.lane.b32.xlu0 %v1589, 96
    %v1591 = vpop.permute.xlu0 %1590
    %v1593 = vsel %vm1184, %v1540, %v1557
    %v1594 = vsel %vm1186, %v1593, %v1574
    %v1595 = vsel %vm1188, %v1594, %v1591
    %1596 = vst [vmem:[#allocation8 + $0x30] sm:$0xff] %v1595
    %v1597 = vsel %vm1124, %v1527, %v960
    %v1598 = vsel %vm1127, %v1529, %v1597
    %v1599 = vsel %vm1130, %v1531, %v1598
    %v1600 = vsel %vm1112, %v1535, %v1533
    %v1601 = vsel %vm1115, %v1537, %v1600
    %v1602 = vsel %vm1118, %v1539, %v1601
    %v1605 = vsel %vm1124, %v980, %v1542
    %v1606 = vsel %vm1127, %v1544, %v1605
    %v1607 = vsel %vm1130, %v1546, %v1606
    %v1608 = vsel %vm1112, %v1550, %v1548
    %v1609 = vsel %vm1115, %v1552, %v1608
    %v1610 = vsel %vm1118, %v1554, %v1609
    %1611 = vrot.lane.b32.xlu0 %v1607, 32
    %v1612 = vpop.permute.xlu0 %1611
    %1613 = vrot.lane.b32.xlu0 %v1610, 32
    %v1614 = vpop.permute.xlu0 %1613
    %v1617 = vsel %vm1124, %v1560, %v1559
    %v1618 = vsel %vm1127, %v1000, %v1617
    %v1619 = vsel %vm1130, %v1563, %v1618
    %v1620 = vsel %vm1112, %v1567, %v1565
    %v1621 = vsel %vm1115, %v1569, %v1620
    %v1622 = vsel %vm1118, %v1571, %v1621
    %1623 = vrot.lane.b32.xlu0 %v1619, 64
    %v1624 = vpop.permute.xlu0 %1623
    %1625 = vrot.lane.b32.xlu0 %v1622, 64
    %v1626 = vpop.permute.xlu0 %1625
    %v1629 = vsel %vm1124, %v1577, %v1576
    %v1630 = vsel %vm1127, %v1579, %v1629
    %v1631 = vsel %vm1130, %v1020, %v1630
    %v1632 = vsel %vm1112, %v1584, %v1582
    %v1633 = vsel %vm1115, %v1586, %v1632
    %v1634 = vsel %vm1118, %v1588, %v1633
    %1635 = vrot.lane.b32.xlu0 %v1631, 96
    %v1636 = vpop.permute.xlu0 %1635
    %1637 = vrot.lane.b32.xlu0 %v1634, 96
    %v1638 = vpop.permute.xlu0 %1637
    %v1641 = vsel %vm1184, %v1599, %v1612
    %v1642 = vsel %vm1184, %v1602, %v1614
    %v1643 = vsel %vm1186, %v1641, %v1624
    %v1644 = vsel %vm1186, %v1642, %v1626
    %v1645 = vsel %vm1188, %v1643, %v1636
    %v1646 = vsel %vm1188, %v1644, %v1638
    %v1649 = vrot.slane %v1645, 4
    %v1650 = vrot.slane %v1646, 4
    %v1651 = vsel %vm1243, %v1649, %v1650
    %1653 = vst [vmem:[#allocation8 + $0x38] sm:$0xff] %v1651
    // Predicated region
    $region26: #{tpu_custom_call.1} parent=1 // pred_check
      _
    $region27: #{tpu_custom_call.1} parent=1 // pred_check_branch
      %1655 = sbr.rel (0) target = $region29
    $region28: #{tpu_custom_call.1} parent=1 // pred_region
      %s1657 = ssub.s32 1024, 1024
      %1658 = vsyncadd [#allocation4], %s1657
      %s1660 = sshll.u32 [#allocation8], 4
      %s1661 = int_to_ptr.vmem [resolvable:$true] %s1660
      %1663 = dma.vmem_to_hbm [thread:$0]  %s1661, 1024, %s3, [#allocation4]
    $region29: #{tpu_custom_call.1} parent=1 // pred_fallthru
      _
    // Predicated region
    $region30: #{tpu_custom_call.1} parent=1 // pred_check
      _
    $region31: #{tpu_custom_call.1} parent=1 // pred_check_branch
      %1665 = sbr.rel (0) target = $region33
    $region32: #{tpu_custom_call.1} parent=1 // pred_region
      %1666 = dma.done [#allocation4], 1024
    $region33: #{tpu_custom_call.1} parent=1 // pred_fallthru
      _
    %1667 = vsyncpa [#allocation3], 1
    %1668 = vsyncpa [#allocation6], 1
    %1669 = vsyncpa [#allocation4], 1

</llo_original>
